<compile_context>
chip_gen: v7x
topology: tpu7x:2x2x1
jax: 0.10.0
libtpu: 0.0.40
codegen_flags: <defaults>
</compile_context>

<pallas_src>
import jax
import jax.numpy as jnp
from jax.experimental import pallas as pl
from jax.experimental.pallas import tpu as pltpu


def _row_sum_mxu(v, ones_nn):
    # Row-sum replicated across every lane via an all-ones matmul: runs on the
    # (otherwise idle) MXU instead of the XLU, and needs no lane broadcast.
    return jnp.dot(v, ones_nn, precision=jax.lax.Precision.HIGHEST,
                   preferred_element_type=jnp.float32)


def _trunk(x, w, p):
    """Linear -> LayerNorm -> softmax for one modality.

    x : (TM, D)  f32 activations
    w : (D, L)   f32 weight
    p : (3, L)   rows = [bias, gamma, beta]
    """
    n = w.shape[1]
    inv_n = jnp.float32(1.0 / n)
    ones_nn = jnp.ones((n, n), jnp.float32)

    h = jnp.dot(x, w, preferred_element_type=jnp.float32) + p[0:1, :]

    # LayerNorm (eps = PyTorch default 1e-5); sums on the MXU.
    mu = _row_sum_mxu(h, ones_nn) * inv_n
    d = h - mu
    var = _row_sum_mxu(d * d, ones_nn) * inv_n
    hn = d * jax.lax.rsqrt(var + 1e-5) * p[1:2, :] + p[2:3, :]

    # SimplexNorm == softmax over this modality's lanes.
    m = jnp.max(hn, axis=-1, keepdims=True)        # XLU (only cross-lane op left)
    e = jnp.exp(hn - m)                            # EUP
    denom = _row_sum_mxu(e, ones_nn)               # MXU
    return e / denom                               # exact divide -> exact simplex


def _fusion_kernel(xr_ref, xp_ref, wr_ref, wp_ref, pr_ref, pp_ref, o_ref):
    lat_rgb = _trunk(xr_ref[...].astype(jnp.float32), wr_ref[...], pr_ref[...])
    lat_prop = _trunk(xp_ref[...].astype(jnp.float32), wp_ref[...], pp_ref[...])
    # Both modalities land pre-concatenated in lanes -> one dense store per tile.
    o_ref[...] = jnp.concatenate([lat_rgb, lat_prop], axis=-1).astype(o_ref.dtype)


def _pick_tm(batch):
    """Row-tile size.

    Big tiles amortize the ~0.35us fixed per-grid-step cost (a tile is only
    ~(D_total+L_total)*tm*4 bytes, nowhere near any VMEM limit), but keep at
    least two grid steps when the batch allows, so both v7x TensorCores get
    work under dimension_semantics=("parallel",).
    """
    if batch % 8 != 0 or batch < 16:
        return batch                      # full-array block is always legal
    tm = min(4096, batch // 2)            # >= 2 tiles for megacore sharding
    tm -= tm % 8
    while batch % tm != 0:                # exact grid, keep 8-row alignment
        tm -= 8
    return tm


def multimodal_fusion_forward(repr_rgb, repr_prop, w_rgb, w_prop, p_rgb, p_prop):
    B = repr_rgb.shape[0]
    d_rgb, l_rgb = w_rgb.shape
    d_prop, l_prop = w_prop.shape
    l_total = l_rgb + l_prop
    out_dtype = repr_rgb.dtype

    tm = _pick_tm(B)
    grid = (B // tm,)

    itemsize = jnp.dtype(out_dtype).itemsize
    cost = pl.CostEstimate(
        flops=(2 * B * (d_rgb * l_rgb + d_prop * l_prop)
               + 6 * B * (l_rgb * l_rgb + l_prop * l_prop)),
        transcendentals=B * l_total,
        bytes_accessed=(B * (d_rgb + d_prop + l_total) * itemsize
                        + 4 * (d_rgb * l_rgb + d_prop * l_prop + 3 * l_total)),
    )

    return pl.pallas_call(
        _fusion_kernel,
        out_shape=jax.ShapeDtypeStruct((B, l_total), out_dtype),
        grid=grid,
        in_specs=[
            pl.BlockSpec((tm, d_rgb), lambda i: (i, 0)),       # rgb activations
            pl.BlockSpec((tm, d_prop), lambda i: (i, 0)),      # prop activations
            pl.BlockSpec((d_rgb, l_rgb), lambda i: (0, 0)),    # rgb weight (resident)
            pl.BlockSpec((d_prop, l_prop), lambda i: (0, 0)),  # prop weight (resident)
            pl.BlockSpec((3, l_rgb), lambda i: (0, 0)),        # rgb [bias;gamma;beta]
            pl.BlockSpec((3, l_prop), lambda i: (0, 0)),       # prop [bias;gamma;beta]
        ],
        out_specs=pl.BlockSpec((tm, l_total), lambda i: (i, 0)),
        compiler_params=pltpu.CompilerParams(
            dimension_semantics=("parallel",)),  # shards row tiles across v7x TCs
        cost_estimate=cost,
    )(repr_rgb, repr_prop, w_rgb, w_prop, p_rgb, p_prop)


class MultimodalFusionPallas:
    """JAX/Pallas port of the PyTorch MultimodalFusion module."""

    def __init__(self, repr_rgb_dim, repr_prop_dim, latent_rgb_dim,
                 latent_prop_dim, key):
        k1, k2 = jax.random.split(key)
        # TODO(synk): PyTorch uses utils.weight_init (orthogonal, zero bias);
        # a scaled normal stands in for that init here.
        self.w_rgb = (jax.random.normal(k1, (repr_rgb_dim, latent_rgb_dim),
                                        jnp.float32)
                      / jnp.sqrt(jnp.float32(repr_rgb_dim)))
        self.w_prop = (jax.random.normal(k2, (repr_prop_dim, latent_prop_dim),
                                         jnp.float32)
                       / jnp.sqrt(jnp.float32(repr_prop_dim)))
        # Packed per-channel params, rows = [bias, gamma, beta].
        self.p_rgb = jnp.stack([jnp.zeros((latent_rgb_dim,), jnp.float32),
                                jnp.ones((latent_rgb_dim,), jnp.float32),
                                jnp.zeros((latent_rgb_dim,), jnp.float32)])
        self.p_prop = jnp.stack([jnp.zeros((latent_prop_dim,), jnp.float32),
                                 jnp.ones((latent_prop_dim,), jnp.float32),
                                 jnp.zeros((latent_prop_dim,), jnp.float32)])
        self.l_rgb = latent_rgb_dim
        self.l_prop = latent_prop_dim

    def __call__(self, repr_rgb, repr_prop):
        return multimodal_fusion_forward(repr_rgb, repr_prop,
                                         self.w_rgb, self.w_prop,
                                         self.p_rgb, self.p_prop)


def _reference(mod, repr_rgb, repr_prop):
    """Pure-JAX reference for correctness checking."""
    def trunk(x, w, p):
        h = x @ w + p[0]
        mu = jnp.mean(h, axis=-1, keepdims=True)
        var = jnp.mean((h - mu) ** 2, axis=-1, keepdims=True)
        hn = (h - mu) / jnp.sqrt(var + 1e-5) * p[1] + p[2]
        return jax.nn.softmax(hn, axis=-1)
    return jnp.concatenate([trunk(repr_rgb, mod.w_rgb, mod.p_rgb),
                            trunk(repr_prop, mod.w_prop, mod.p_prop)], axis=-1)


if __name__ == "__main__":
    key = jax.random.PRNGKey(0)
    k_in1, k_in2, k_param = jax.random.split(key, 3)

    B = 8
    repr_rgb_dim, repr_prop_dim = 32, 24
    latent_rgb_dim, latent_prop_dim = 32, 16

    repr_rgb = jax.random.normal(k_in1, (B, repr_rgb_dim), jnp.float32)
    repr_prop = jax.random.normal(k_in2, (B, repr_prop_dim), jnp.float32)

    mod = MultimodalFusionPallas(repr_rgb_dim, repr_prop_dim,
                                 latent_rgb_dim, latent_prop_dim, k_param)

    out = jax.block_until_ready(mod(repr_rgb, repr_prop))

    ref = _reference(mod, repr_rgb, repr_prop)
    assert out.shape == (B, latent_rgb_dim + latent_prop_dim), out.shape
    assert jnp.allclose(out, ref, atol=2e-3, rtol=2e-3), "mismatch vs reference"
    # Each modality's latent must sum to 1 per row (simplex property); the
    # exact divide keeps this to f32 rounding.
    srgb = jnp.sum(out[:, :latent_rgb_dim], axis=-1)
    sprop = jnp.sum(out[:, latent_rgb_dim:], axis=-1)
    assert jnp.allclose(srgb, 1.0, atol=1e-3), srgb
    assert jnp.allclose(sprop, 1.0, atol=1e-3), sprop

    print("KERNEL_OK")
</pallas_src>

<mosaic_0001>
module attributes {stable_mosaic.version = 11 : i64} {
  func.func @_fusion_kernel(%arg0: i32, %arg1: memref<8x32xf32, #tpu.memory_space<vmem>>, %arg2: memref<8x24xf32, #tpu.memory_space<vmem>>, %arg3: memref<32x32xf32, #tpu.memory_space<vmem>>, %arg4: memref<24x16xf32, #tpu.memory_space<vmem>>, %arg5: memref<3x32xf32, #tpu.memory_space<vmem>>, %arg6: memref<3x16xf32, #tpu.memory_space<vmem>>, %arg7: memref<8x48xf32, #tpu.memory_space<vmem>>) attributes {dimension_semantics = [#tpu.dimension_semantics<parallel>], iteration_bounds = array<i64: 1>, scalar_prefetch = 0 : i64, scratch_operands = 0 : i64, tpu.core_type = #tpu.core_type<tc>, window_params = [{transform_indices = @transform_0, window_bounds = array<i64: 8, 32>}, {transform_indices = @transform_1, window_bounds = array<i64: 8, 24>}, {pipeline_mode = #tpu.pipeline_mode<synchronous>, transform_indices = @transform_2, window_bounds = array<i64: 32, 32>}, {pipeline_mode = #tpu.pipeline_mode<synchronous>, transform_indices = @transform_3, window_bounds = array<i64: 24, 16>}, {pipeline_mode = #tpu.pipeline_mode<synchronous>, transform_indices = @transform_4, window_bounds = array<i64: 3, 32>}, {pipeline_mode = #tpu.pipeline_mode<synchronous>, transform_indices = @transform_5, window_bounds = array<i64: 3, 16>}, {transform_indices = @transform_6, window_bounds = array<i64: 8, 48>}]} {
    %c0 = arith.constant 0 : index
    %c0_0 = arith.constant 0 : index
    %0 = vector.load %arg1[%c0, %c0_0] : memref<8x32xf32, #tpu.memory_space<vmem>>, vector<8x32xf32>
    %c0_1 = arith.constant 0 : index
    %c0_2 = arith.constant 0 : index
    %1 = vector.load %arg3[%c0_1, %c0_2] : memref<32x32xf32, #tpu.memory_space<vmem>>, vector<32x32xf32>
    %c0_3 = arith.constant 0 : index
    %c0_4 = arith.constant 0 : index
    %2 = vector.load %arg5[%c0_3, %c0_4] : memref<3x32xf32, #tpu.memory_space<vmem>>, vector<3x32xf32>
    %cst = arith.constant 1.000000e+00 : f32
    %3 = vector.broadcast %cst : f32 to vector<32x32xf32>
    %cst_5 = arith.constant dense<0.000000e+00> : vector<8x32xf32>
    %4 = tpu.matmul %0, %1, %cst_5 {dimension_numbers = #tpu.dot_dimension_numbers<[1], [0], [0], [1], [0, 0, 1, 1], [], []>} : vector<8x32xf32>, vector<32x32xf32>, vector<8x32xf32> -> vector<8x32xf32>
    %5 = vector.extract_strided_slice %2 {offsets = [0, 0], sizes = [1, 32], strides = [1, 1]} : vector<3x32xf32> to vector<1x32xf32>
    %6 = vector.broadcast %5 : vector<1x32xf32> to vector<8x32xf32>
    %7 = arith.addf %4, %6 : vector<8x32xf32>
    %cst_6 = arith.constant dense<0.000000e+00> : vector<8x32xf32>
    %8 = tpu.matmul %7, %3, %cst_6 {dimension_numbers = #tpu.dot_dimension_numbers<[1], [0], [0], [1], [0, 0, 1, 1], [], []>, precision = #tpu.contract_precision<fp32>} : vector<8x32xf32>, vector<32x32xf32>, vector<8x32xf32> -> vector<8x32xf32>
    %cst_7 = arith.constant 3.125000e-02 : f32
    %9 = vector.broadcast %cst_7 : f32 to vector<8x32xf32>
    %10 = arith.mulf %8, %9 : vector<8x32xf32>
    %11 = arith.subf %7, %10 : vector<8x32xf32>
    %12 = arith.mulf %11, %11 : vector<8x32xf32>
    %cst_8 = arith.constant dense<0.000000e+00> : vector<8x32xf32>
    %13 = tpu.matmul %12, %3, %cst_8 {dimension_numbers = #tpu.dot_dimension_numbers<[1], [0], [0], [1], [0, 0, 1, 1], [], []>, precision = #tpu.contract_precision<fp32>} : vector<8x32xf32>, vector<32x32xf32>, vector<8x32xf32> -> vector<8x32xf32>
    %cst_9 = arith.constant 3.125000e-02 : f32
    %14 = vector.broadcast %cst_9 : f32 to vector<8x32xf32>
    %15 = arith.mulf %13, %14 : vector<8x32xf32>
    %cst_10 = arith.constant 9.99999974E-6 : f32
    %16 = vector.broadcast %cst_10 : f32 to vector<8x32xf32>
    %17 = arith.addf %15, %16 : vector<8x32xf32>
    %18 = math.rsqrt %17 : vector<8x32xf32>
    %19 = arith.mulf %11, %18 : vector<8x32xf32>
    %20 = vector.extract_strided_slice %2 {offsets = [1, 0], sizes = [1, 32], strides = [1, 1]} : vector<3x32xf32> to vector<1x32xf32>
    %21 = vector.broadcast %20 : vector<1x32xf32> to vector<8x32xf32>
    %22 = arith.mulf %19, %21 : vector<8x32xf32>
    %23 = vector.extract_strided_slice %2 {offsets = [2, 0], sizes = [1, 32], strides = [1, 1]} : vector<3x32xf32> to vector<1x32xf32>
    %24 = vector.broadcast %23 : vector<1x32xf32> to vector<8x32xf32>
    %25 = arith.addf %22, %24 : vector<8x32xf32>
    %cst_11 = arith.constant dense<0xFF800000> : vector<8xf32>
    %26 = vector.multi_reduction <maximumf>, %25, %cst_11 [1] : vector<8x32xf32> to vector<8xf32>
    %27 = vector.shape_cast %26 : vector<8xf32> to vector<8x1xf32>
    %28 = vector.broadcast %27 : vector<8x1xf32> to vector<8x32xf32>
    %29 = arith.subf %25, %28 : vector<8x32xf32>
    %30 = math.exp %29 : vector<8x32xf32>
    %cst_12 = arith.constant dense<0.000000e+00> : vector<8x32xf32>
    %31 = tpu.matmul %30, %3, %cst_12 {dimension_numbers = #tpu.dot_dimension_numbers<[1], [0], [0], [1], [0, 0, 1, 1], [], []>, precision = #tpu.contract_precision<fp32>} : vector<8x32xf32>, vector<32x32xf32>, vector<8x32xf32> -> vector<8x32xf32>
    %32 = arith.divf %30, %31 : vector<8x32xf32>
    %c0_13 = arith.constant 0 : index
    %c0_14 = arith.constant 0 : index
    %33 = vector.load %arg2[%c0_13, %c0_14] : memref<8x24xf32, #tpu.memory_space<vmem>>, vector<8x24xf32>
    %c0_15 = arith.constant 0 : index
    %c0_16 = arith.constant 0 : index
    %34 = vector.load %arg4[%c0_15, %c0_16] : memref<24x16xf32, #tpu.memory_space<vmem>>, vector<24x16xf32>
    %c0_17 = arith.constant 0 : index
    %c0_18 = arith.constant 0 : index
    %35 = vector.load %arg6[%c0_17, %c0_18] : memref<3x16xf32, #tpu.memory_space<vmem>>, vector<3x16xf32>
    %cst_19 = arith.constant 1.000000e+00 : f32
    %36 = vector.broadcast %cst_19 : f32 to vector<16x16xf32>
    %cst_20 = arith.constant dense<0.000000e+00> : vector<8x16xf32>
    %37 = tpu.matmul %33, %34, %cst_20 {dimension_numbers = #tpu.dot_dimension_numbers<[1], [0], [0], [1], [0, 0, 1, 1], [], []>} : vector<8x24xf32>, vector<24x16xf32>, vector<8x16xf32> -> vector<8x16xf32>
    %38 = vector.extract_strided_slice %35 {offsets = [0, 0], sizes = [1, 16], strides = [1, 1]} : vector<3x16xf32> to vector<1x16xf32>
    %39 = vector.broadcast %38 : vector<1x16xf32> to vector<8x16xf32>
    %40 = arith.addf %37, %39 : vector<8x16xf32>
    %cst_21 = arith.constant dense<0.000000e+00> : vector<8x16xf32>
    %41 = tpu.matmul %40, %36, %cst_21 {dimension_numbers = #tpu.dot_dimension_numbers<[1], [0], [0], [1], [0, 0, 1, 1], [], []>, precision = #tpu.contract_precision<fp32>} : vector<8x16xf32>, vector<16x16xf32>, vector<8x16xf32> -> vector<8x16xf32>
    %cst_22 = arith.constant 6.250000e-02 : f32
    %42 = vector.broadcast %cst_22 : f32 to vector<8x16xf32>
    %43 = arith.mulf %41, %42 : vector<8x16xf32>
    %44 = arith.subf %40, %43 : vector<8x16xf32>
    %45 = arith.mulf %44, %44 : vector<8x16xf32>
    %cst_23 = arith.constant dense<0.000000e+00> : vector<8x16xf32>
    %46 = tpu.matmul %45, %36, %cst_23 {dimension_numbers = #tpu.dot_dimension_numbers<[1], [0], [0], [1], [0, 0, 1, 1], [], []>, precision = #tpu.contract_precision<fp32>} : vector<8x16xf32>, vector<16x16xf32>, vector<8x16xf32> -> vector<8x16xf32>
    %cst_24 = arith.constant 6.250000e-02 : f32
    %47 = vector.broadcast %cst_24 : f32 to vector<8x16xf32>
    %48 = arith.mulf %46, %47 : vector<8x16xf32>
    %cst_25 = arith.constant 9.99999974E-6 : f32
    %49 = vector.broadcast %cst_25 : f32 to vector<8x16xf32>
    %50 = arith.addf %48, %49 : vector<8x16xf32>
    %51 = math.rsqrt %50 : vector<8x16xf32>
    %52 = arith.mulf %44, %51 : vector<8x16xf32>
    %53 = vector.extract_strided_slice %35 {offsets = [1, 0], sizes = [1, 16], strides = [1, 1]} : vector<3x16xf32> to vector<1x16xf32>
    %54 = vector.broadcast %53 : vector<1x16xf32> to vector<8x16xf32>
    %55 = arith.mulf %52, %54 : vector<8x16xf32>
    %56 = vector.extract_strided_slice %35 {offsets = [2, 0], sizes = [1, 16], strides = [1, 1]} : vector<3x16xf32> to vector<1x16xf32>
    %57 = vector.broadcast %56 : vector<1x16xf32> to vector<8x16xf32>
    %58 = arith.addf %55, %57 : vector<8x16xf32>
    %cst_26 = arith.constant dense<0xFF800000> : vector<8xf32>
    %59 = vector.multi_reduction <maximumf>, %58, %cst_26 [1] : vector<8x16xf32> to vector<8xf32>
    %60 = vector.shape_cast %59 : vector<8xf32> to vector<8x1xf32>
    %61 = vector.broadcast %60 : vector<8x1xf32> to vector<8x16xf32>
    %62 = arith.subf %58, %61 : vector<8x16xf32>
    %63 = math.exp %62 : vector<8x16xf32>
    %cst_27 = arith.constant dense<0.000000e+00> : vector<8x16xf32>
    %64 = tpu.matmul %63, %36, %cst_27 {dimension_numbers = #tpu.dot_dimension_numbers<[1], [0], [0], [1], [0, 0, 1, 1], [], []>, precision = #tpu.contract_precision<fp32>} : vector<8x16xf32>, vector<16x16xf32>, vector<8x16xf32> -> vector<8x16xf32>
    %65 = arith.divf %63, %64 : vector<8x16xf32>
    %66 = tpu.concatenate %32, %65 in 1 : vector<8x32xf32>, vector<8x16xf32> -> vector<8x48xf32>
    %c0_28 = arith.constant 0 : index
    %c0_29 = arith.constant 0 : index
    %67 = vector.load %arg7[%c0_28, %c0_29] : memref<8x48xf32, #tpu.memory_space<vmem>>, vector<8x48xf32>
    tpu.vector_store %arg7[%c0_28, %c0_29], %66 {strides = array<i32>} : memref<8x48xf32, #tpu.memory_space<vmem>>, vector<8x48xf32>,
    return
  }
  func.func @transform_0(%arg0: i32) -> (i32, i32) {
    %c0_i32 = arith.constant 0 : i32
    %c0_i32_0 = arith.constant 0 : i32
    return %arg0, %c0_i32 : i32, i32
  }
  func.func @transform_1(%arg0: i32) -> (i32, i32) {
    %c0_i32 = arith.constant 0 : i32
    %c0_i32_0 = arith.constant 0 : i32
    return %arg0, %c0_i32 : i32, i32
  }
  func.func @transform_2(%arg0: i32) -> (i32, i32) {
    %c0_i32 = arith.constant 0 : i32
    %c0_i32_0 = arith.constant 0 : i32
    %c0_i32_1 = arith.constant 0 : i32
    return %c0_i32, %c0_i32_0 : i32, i32
  }
  func.func @transform_3(%arg0: i32) -> (i32, i32) {
    %c0_i32 = arith.constant 0 : i32
    %c0_i32_0 = arith.constant 0 : i32
    %c0_i32_1 = arith.constant 0 : i32
    return %c0_i32, %c0_i32_0 : i32, i32
  }
  func.func @transform_4(%arg0: i32) -> (i32, i32) {
    %c0_i32 = arith.constant 0 : i32
    %c0_i32_0 = arith.constant 0 : i32
    %c0_i32_1 = arith.constant 0 : i32
    return %c0_i32, %c0_i32_0 : i32, i32
  }
  func.func @transform_5(%arg0: i32) -> (i32, i32) {
    %c0_i32 = arith.constant 0 : i32
    %c0_i32_0 = arith.constant 0 : i32
    %c0_i32_1 = arith.constant 0 : i32
    return %c0_i32, %c0_i32_0 : i32, i32
  }
  func.func @transform_6(%arg0: i32) -> (i32, i32) {
    %c0_i32 = arith.constant 0 : i32
    %c0_i32_0 = arith.constant 0 : i32
    return %arg0, %c0_i32 : i32, i32
  }
}

</mosaic_0001>

<llo_original>
// kernel: tpu_custom_call.1
$region0: #{tpu_custom_call.1}
  #allocation0 [shape = 'u32[]', space=smem, size = 0x4, offset = 0x4, fixed_abs, tag = 'smem constant byte address 0x4 - core index']
  #allocation1 [shape = 'u32[144,128]{1,0:T(1,128)}', space=vmem, size = 0x12000, scoped, tag = 'internal scratch']
  %s0 = inlined_call_operand.vmem [shape: f32[8,32], index: 0, kind: input, shape index: {}]
  %s1 = inlined_call_operand.hbm [shape: f32[8,24], index: 1, kind: input, shape index: {}]
  %s2 = inlined_call_operand.vmem [shape: f32[32,32], index: 2, kind: input, shape index: {}]
  %s3 = inlined_call_operand.vmem [shape: f32[24,16], index: 3, kind: input, shape index: {}]
  %s4 = inlined_call_operand.vmem [shape: f32[3,32], index: 4, kind: input, shape index: {}]
  %s5 = inlined_call_operand.vmem [shape: f32[3,16], index: 5, kind: input, shape index: {}]
  %s6 = inlined_call_operand.hbm [shape: f32[8,48], index: 6, kind: output, shape index: {}]
  %s7 = sld [smem:[#allocation0]]
  $region38: #{tpu_custom_call.1} parent=0
    _
  %s9 = ssub.s32 1, %s7
  %s10 = scalar_select 0, %s9, %s7
  $region1: #{tpu_custom_call.1} parent=0
    #allocation2 [shape = 'u8[4096]{0}', space=vmem, size = 0x1000, scoped, tag = 'input window, operand 1, single buffered']
    #allocation3 [shape = 's32[1]{0}', space=sflag, size = 0x4, scoped, tag = 'scoped memory for tpu_custom_call.1']
    #allocation4 [shape = 's32[1]{0}', space=sflag, size = 0x4, scoped, tag = 'scoped memory for tpu_custom_call.1']
    #allocation5 [shape = 'u8[4096]{0}', space=vmem, size = 0x1000, scoped, tag = 'output window, operand 0, single buffered']
    %11 = vsyncpa [#allocation3], 0
    %12 = vsyncpa [#allocation4], 0
    // Predicated region
    $region2: #{tpu_custom_call.1} parent=1 // pred_check
      _
    $region3: #{tpu_custom_call.1} parent=1 // pred_check_branch
      %14 = sbr.rel (0) target = $region5
    $region4: #{tpu_custom_call.1} parent=1 // pred_region
      _
    $region5: #{tpu_custom_call.1} parent=1 // pred_fallthru
      _
    // Predicated region
    $region6: #{tpu_custom_call.1} parent=1 // pred_check
      _
    $region7: #{tpu_custom_call.1} parent=1 // pred_check_branch
      %16 = sbr.rel (0) target = $region9
    $region8: #{tpu_custom_call.1} parent=1 // pred_region
      %s18 = ssub.s32 128, 128
      %19 = vsyncadd [#allocation3], %s18
      %s21 = sshll.u32 [#allocation2], 4
      %s22 = int_to_ptr.vmem [resolvable:$true] %s21
      %24 = dma.hbm_to_vmem [thread:$0]  %s1, 128, %s22, [#allocation3]
    $region9: #{tpu_custom_call.1} parent=1 // pred_fallthru
      _
    // Predicated region
    $region10: #{tpu_custom_call.1} parent=1 // pred_check
      _
    $region11: #{tpu_custom_call.1} parent=1 // pred_check_branch
      %26 = sbr.rel (0) target = $region13
    $region12: #{tpu_custom_call.1} parent=1 // pred_region
      _
    $region13: #{tpu_custom_call.1} parent=1 // pred_fallthru
      _
    // Predicated region
    $region14: #{tpu_custom_call.1} parent=1 // pred_check
      _
    $region15: #{tpu_custom_call.1} parent=1 // pred_check_branch
      %28 = sbr.rel (0) target = $region17
    $region16: #{tpu_custom_call.1} parent=1 // pred_region
      _
    $region17: #{tpu_custom_call.1} parent=1 // pred_fallthru
      _
    // Predicated region
    $region18: #{tpu_custom_call.1} parent=1 // pred_check
      _
    $region19: #{tpu_custom_call.1} parent=1 // pred_check_branch
      %30 = sbr.rel (0) target = $region21
    $region20: #{tpu_custom_call.1} parent=1 // pred_region
      _
    $region21: #{tpu_custom_call.1} parent=1 // pred_fallthru
      _
    // Predicated region
    $region22: #{tpu_custom_call.1} parent=1 // pred_check
      _
    $region23: #{tpu_custom_call.1} parent=1 // pred_check_branch
      %32 = sbr.rel (0) target = $region25
    $region24: #{tpu_custom_call.1} parent=1 // pred_region
      _
    $region25: #{tpu_custom_call.1} parent=1 // pred_fallthru
      _
    // Predicated region
    $region26: #{tpu_custom_call.1} parent=1 // pred_check
      _
    $region27: #{tpu_custom_call.1} parent=1 // pred_check_branch
      %34 = sbr.rel (0) target = $region29
    $region28: #{tpu_custom_call.1} parent=1 // pred_region
      %35 = dma.done [#allocation3], 128
    $region29: #{tpu_custom_call.1} parent=1 // pred_fallthru
      _
    %v36 = vld [vmem:[%s0] sm:$0xff]
    %v37 = vld [vmem:[%s2] sm:$0xff]
    %v38 = vld [vmem:[%s2 + $0x8] sm:$0xff]
    %v39 = vld [vmem:[%s2 + $0x10] sm:$0xff]
    %v40 = vld [vmem:[%s2 + $0x18] sm:$0xff]
    %v41 = vld [vmem:[%s4] sm:$0x7]
    %v42 = vlaneseq
    %v43 = vshrl.u32 %v42, 7
    %v44 = vsub.s32 0, %v43
    %v45 = vrot.slane %v41, %v44
    %vm46 = vcmask 261120
    %v48 = vsel %vm46, %v36, 0
    %50 = vmatprep.subr.mxu0 0.0
    %51 = vmatpush1.msra.mxu0 %v37
    %52 = vmatprep.subr.mxu0 0.0
    %53 = vmatpush1.msra.mxu0 %v38
    %54 = vmatprep.subr.mxu0 0.0
    %55 = vmatpush1.msra.mxu0 %v39
    %56 = vmatprep.subr.mxu0 0.0
    %57 = vmatpush1.msra.mxu0 %v40
    %58 = vmatprep.subr.mxu0 0.0
    %59 = vmatpush1.msra.mxu0 0.0
    %60 = vmatprep.subr.mxu0 0.0
    %61 = vmatpush1.msra.mxu0 0.0
    %62 = vmatprep.subr.mxu0 0.0
    %63 = vmatpush1.msra.mxu0 0.0
    %64 = vmatprep.subr.mxu0 0.0
    %65 = vmatpush1.msra.mxu0 0.0
    %66 = vmatprep.subr.mxu0 0.0
    %67 = vmatpush1.msra.mxu0 0.0
    %68 = vmatprep.subr.mxu0 0.0
    %69 = vmatpush1.msra.mxu0 0.0
    %70 = vmatprep.subr.mxu0 0.0
    %71 = vmatpush1.msra.mxu0 0.0
    %72 = vmatprep.subr.mxu0 0.0
    %73 = vmatpush1.msra.mxu0 0.0
    %74 = vmatprep.subr.mxu0 0.0
    %75 = vmatpush1.msra.mxu0 0.0
    %76 = vmatprep.subr.mxu0 0.0
    %77 = vmatpush1.msra.mxu0 0.0
    %78 = vmatprep.subr.mxu0 0.0
    %79 = vmatpush1.msra.mxu0 0.0
    %80 = vmatprep.subr.mxu0 0.0
    %81 = vmatpush1.msra.mxu0 0.0
    %82 = vmatprep.subr.mxu0 0.0
    %83 = vmatpush1.msra.mxu0 0.0
    %84 = vmatprep.subr.mxu0 0.0
    %85 = vmatpush1.msra.mxu0 0.0
    %86 = vmatprep.subr.mxu0 0.0
    %87 = vmatpush1.msra.mxu0 0.0
    %88 = vmatprep.subr.mxu0 0.0
    %89 = vmatpush1.msra.mxu0 0.0
    %90 = vmatprep.subr.mxu0 0.0
    %91 = vmatpush1.msra.mxu0 0.0
    %92 = vmatprep.subr.mxu0 0.0
    %93 = vmatpush1.msra.mxu0 0.0
    %94 = vmatprep.subr.mxu0 0.0
    %95 = vmatpush1.msra.mxu0 0.0
    %96 = vmatprep.subr.mxu0 0.0
    %97 = vmatpush1.msra.mxu0 0.0
    %98 = vmatprep.subr.mxu0 0.0
    %99 = vmatpush1.msra.mxu0 0.0
    %100 = vmatprep.subr.mxu0 0.0
    %101 = vmatpush1.msra.mxu0 0.0
    %102 = vmatprep.subr.mxu0 0.0
    %103 = vmatpush1.msra.mxu0 0.0
    %104 = vmatprep.subr.mxu0 0.0
    %105 = vmatpush1.msra.mxu0 0.0
    %106 = vmatprep.subr.mxu0 0.0
    %107 = vmatpush1.msra.mxu0 0.0
    %108 = vmatprep.subr.mxu0 0.0
    %109 = vmatpush1.msra.mxu0 0.0
    %110 = vmatprep.subr.mxu0 0.0
    %111 = vmatpush1.msra.mxu0 0.0
    %112 = vmatprep.subr.mxu0 0.0
    %113 = vmatpush1.msra.mxu0 0.0
    %114 = vmatprep.mubr.f32.mxu0 0.0
    %115 = vmatmul.mubr.f32.gmra.mrb[0].mxu0 %v48
    %v116 = vpop.f32.mrb[0].mxu0
    %v117 = vadd.f32 %v45, %v116
    %v118 = vpop.f32.mrb[0].mxu0
    %119 = vdwg.mxu0
    %v121 = vsel %vm46, %v117, 0
    %123 = vmatprep.subr.mxu0 0.0
    %124 = vmatpush1.msra.mxu0 1.0
    %125 = vmatprep.subr.mxu0 0.0
    %126 = vmatpush1.msra.mxu0 1.0
    %127 = vmatprep.subr.mxu0 0.0
    %128 = vmatpush1.msra.mxu0 1.0
    %129 = vmatprep.subr.mxu0 0.0
    %130 = vmatpush1.msra.mxu0 1.0
    %131 = vmatprep.subr.mxu0 0.0
    %132 = vmatpush1.msra.mxu0 0.0
    %133 = vmatprep.subr.mxu0 0.0
    %134 = vmatpush1.msra.mxu0 0.0
    %135 = vmatprep.subr.mxu0 0.0
    %136 = vmatpush1.msra.mxu0 0.0
    %137 = vmatprep.subr.mxu0 0.0
    %138 = vmatpush1.msra.mxu0 0.0
    %139 = vmatprep.subr.mxu0 0.0
    %140 = vmatpush1.msra.mxu0 0.0
    %141 = vmatprep.subr.mxu0 0.0
    %142 = vmatpush1.msra.mxu0 0.0
    %143 = vmatprep.subr.mxu0 0.0
    %144 = vmatpush1.msra.mxu0 0.0
    %145 = vmatprep.subr.mxu0 0.0
    %146 = vmatpush1.msra.mxu0 0.0
    %147 = vmatprep.subr.mxu0 0.0
    %148 = vmatpush1.msra.mxu0 0.0
    %149 = vmatprep.subr.mxu0 0.0
    %150 = vmatpush1.msra.mxu0 0.0
    %151 = vmatprep.subr.mxu0 0.0
    %152 = vmatpush1.msra.mxu0 0.0
    %153 = vmatprep.subr.mxu0 0.0
    %154 = vmatpush1.msra.mxu0 0.0
    %155 = vmatprep.subr.mxu0 0.0
    %156 = vmatpush1.msra.mxu0 0.0
    %157 = vmatprep.subr.mxu0 0.0
    %158 = vmatpush1.msra.mxu0 0.0
    %159 = vmatprep.subr.mxu0 0.0
    %160 = vmatpush1.msra.mxu0 0.0
    %161 = vmatprep.subr.mxu0 0.0
    %162 = vmatpush1.msra.mxu0 0.0
    %163 = vmatprep.subr.mxu0 0.0
    %164 = vmatpush1.msra.mxu0 0.0
    %165 = vmatprep.subr.mxu0 0.0
    %166 = vmatpush1.msra.mxu0 0.0
    %167 = vmatprep.subr.mxu0 0.0
    %168 = vmatpush1.msra.mxu0 0.0
    %169 = vmatprep.subr.mxu0 0.0
    %170 = vmatpush1.msra.mxu0 0.0
    %171 = vmatprep.subr.mxu0 0.0
    %172 = vmatpush1.msra.mxu0 0.0
    %173 = vmatprep.subr.mxu0 0.0
    %174 = vmatpush1.msra.mxu0 0.0
    %175 = vmatprep.subr.mxu0 0.0
    %176 = vmatpush1.msra.mxu0 0.0
    %177 = vmatprep.subr.mxu0 0.0
    %178 = vmatpush1.msra.mxu0 0.0
    %179 = vmatprep.subr.mxu0 0.0
    %180 = vmatpush1.msra.mxu0 0.0
    %181 = vmatprep.subr.mxu0 0.0
    %182 = vmatpush1.msra.mxu0 0.0
    %183 = vmatprep.subr.mxu0 0.0
    %184 = vmatpush1.msra.mxu0 0.0
    %185 = vmatprep.subr.mxu0 0.0
    %186 = vmatpush1.msra.mxu0 0.0
    %187 = vmatprep.mubr.f32.mxu0 0.0
    %v188 = vand.u32 %v121, 4294901760
    %v189 = vsub.f32 %v121, %v188
    %v190 = vand.u32 %v189, 4294901760
    %v191 = vsub.f32 %v189, %v190
    %v192 = vand.u32 %v191, 4294901760
    %193 = vmatmul.mubr.f32.gmra.mrb[0].mxu0 %v192
    %v194 = vpop.f32.mrb[0].mxu0
    %v195 = vadd.f32 0.0, %v194
    %v196 = vpop.f32.mrb[0].mxu0
    %197 = vdwg.mxu0
    %198 = vmatprep.subr.mxu0 0.0
    %199 = vmatpush1.msra.mxu0 0.0
    %200 = vmatprep.subr.mxu0 0.0
    %201 = vmatpush1.msra.mxu0 0.0
    %202 = vmatprep.subr.mxu0 0.0
    %203 = vmatpush1.msra.mxu0 0.0
    %204 = vmatprep.subr.mxu0 0.0
    %205 = vmatpush1.msra.mxu0 0.0
    %206 = vmatprep.subr.mxu0 0.0
    %207 = vmatpush1.msra.mxu0 0.0
    %208 = vmatprep.subr.mxu0 0.0
    %209 = vmatpush1.msra.mxu0 0.0
    %210 = vmatprep.subr.mxu0 0.0
    %211 = vmatpush1.msra.mxu0 0.0
    %212 = vmatprep.subr.mxu0 0.0
    %213 = vmatpush1.msra.mxu0 0.0
    %214 = vmatprep.subr.mxu0 0.0
    %215 = vmatpush1.msra.mxu0 0.0
    %216 = vmatprep.subr.mxu0 0.0
    %217 = vmatpush1.msra.mxu0 0.0
    %218 = vmatprep.subr.mxu0 0.0
    %219 = vmatpush1.msra.mxu0 0.0
    %220 = vmatprep.subr.mxu0 0.0
    %221 = vmatpush1.msra.mxu0 0.0
    %222 = vmatprep.subr.mxu0 0.0
    %223 = vmatpush1.msra.mxu0 0.0
    %224 = vmatprep.subr.mxu0 0.0
    %225 = vmatpush1.msra.mxu0 0.0
    %226 = vmatprep.subr.mxu0 0.0
    %227 = vmatpush1.msra.mxu0 0.0
    %228 = vmatprep.subr.mxu0 0.0
    %229 = vmatpush1.msra.mxu0 0.0
    %230 = vmatprep.subr.mxu0 0.0
    %231 = vmatpush1.msra.mxu0 0.0
    %232 = vmatprep.subr.mxu0 0.0
    %233 = vmatpush1.msra.mxu0 0.0
    %234 = vmatprep.subr.mxu0 0.0
    %235 = vmatpush1.msra.mxu0 0.0
    %236 = vmatprep.subr.mxu0 0.0
    %237 = vmatpush1.msra.mxu0 0.0
    %238 = vmatprep.subr.mxu0 0.0
    %239 = vmatpush1.msra.mxu0 0.0
    %240 = vmatprep.subr.mxu0 0.0
    %241 = vmatpush1.msra.mxu0 0.0
    %242 = vmatprep.subr.mxu0 0.0
    %243 = vmatpush1.msra.mxu0 0.0
    %244 = vmatprep.subr.mxu0 0.0
    %245 = vmatpush1.msra.mxu0 0.0
    %246 = vmatprep.subr.mxu0 0.0
    %247 = vmatpush1.msra.mxu0 0.0
    %248 = vmatprep.subr.mxu0 0.0
    %249 = vmatpush1.msra.mxu0 0.0
    %250 = vmatprep.subr.mxu0 0.0
    %251 = vmatpush1.msra.mxu0 0.0
    %252 = vmatprep.subr.mxu0 0.0
    %253 = vmatpush1.msra.mxu0 0.0
    %254 = vmatprep.subr.mxu0 0.0
    %255 = vmatpush1.msra.mxu0 0.0
    %256 = vmatprep.subr.mxu0 0.0
    %257 = vmatpush1.msra.mxu0 0.0
    %258 = vmatprep.subr.mxu0 0.0
    %259 = vmatpush1.msra.mxu0 0.0
    %260 = vmatprep.subr.mxu0 0.0
    %261 = vmatpush1.msra.mxu0 0.0
    %262 = vmatprep.mubr.f32.mxu0 0.0
    %v263 = vand.u32 %v121, 4294901760
    %264 = vmatmul.mubr.f32.gmra.mrb[0].mxu0 %v263
    %v265 = vpop.f32.mrb[0].mxu0
    %v266 = vadd.f32 %v195, %v265
    %v267 = vpop.f32.mrb[0].mxu0
    %268 = vdwg.mxu0
    %269 = vmatprep.subr.mxu0 0.0
    %270 = vmatpush1.msra.mxu0 0.0
    %271 = vmatprep.subr.mxu0 0.0
    %272 = vmatpush1.msra.mxu0 0.0
    %273 = vmatprep.subr.mxu0 0.0
    %274 = vmatpush1.msra.mxu0 0.0
    %275 = vmatprep.subr.mxu0 0.0
    %276 = vmatpush1.msra.mxu0 0.0
    %277 = vmatprep.subr.mxu0 0.0
    %278 = vmatpush1.msra.mxu0 0.0
    %279 = vmatprep.subr.mxu0 0.0
    %280 = vmatpush1.msra.mxu0 0.0
    %281 = vmatprep.subr.mxu0 0.0
    %282 = vmatpush1.msra.mxu0 0.0
    %283 = vmatprep.subr.mxu0 0.0
    %284 = vmatpush1.msra.mxu0 0.0
    %285 = vmatprep.subr.mxu0 0.0
    %286 = vmatpush1.msra.mxu0 0.0
    %287 = vmatprep.subr.mxu0 0.0
    %288 = vmatpush1.msra.mxu0 0.0
    %289 = vmatprep.subr.mxu0 0.0
    %290 = vmatpush1.msra.mxu0 0.0
    %291 = vmatprep.subr.mxu0 0.0
    %292 = vmatpush1.msra.mxu0 0.0
    %293 = vmatprep.subr.mxu0 0.0
    %294 = vmatpush1.msra.mxu0 0.0
    %295 = vmatprep.subr.mxu0 0.0
    %296 = vmatpush1.msra.mxu0 0.0
    %297 = vmatprep.subr.mxu0 0.0
    %298 = vmatpush1.msra.mxu0 0.0
    %299 = vmatprep.subr.mxu0 0.0
    %300 = vmatpush1.msra.mxu0 0.0
    %301 = vmatprep.subr.mxu0 0.0
    %302 = vmatpush1.msra.mxu0 0.0
    %303 = vmatprep.subr.mxu0 0.0
    %304 = vmatpush1.msra.mxu0 0.0
    %305 = vmatprep.subr.mxu0 0.0
    %306 = vmatpush1.msra.mxu0 0.0
    %307 = vmatprep.subr.mxu0 0.0
    %308 = vmatpush1.msra.mxu0 0.0
    %309 = vmatprep.subr.mxu0 0.0
    %310 = vmatpush1.msra.mxu0 0.0
    %311 = vmatprep.subr.mxu0 0.0
    %312 = vmatpush1.msra.mxu0 0.0
    %313 = vmatprep.subr.mxu0 0.0
    %314 = vmatpush1.msra.mxu0 0.0
    %315 = vmatprep.subr.mxu0 0.0
    %316 = vmatpush1.msra.mxu0 0.0
    %317 = vmatprep.subr.mxu0 0.0
    %318 = vmatpush1.msra.mxu0 0.0
    %319 = vmatprep.subr.mxu0 0.0
    %320 = vmatpush1.msra.mxu0 0.0
    %321 = vmatprep.subr.mxu0 0.0
    %322 = vmatpush1.msra.mxu0 0.0
    %323 = vmatprep.subr.mxu0 0.0
    %324 = vmatpush1.msra.mxu0 0.0
    %325 = vmatprep.subr.mxu0 0.0
    %326 = vmatpush1.msra.mxu0 0.0
    %327 = vmatprep.subr.mxu0 0.0
    %328 = vmatpush1.msra.mxu0 0.0
    %329 = vmatprep.subr.mxu0 0.0
    %330 = vmatpush1.msra.mxu0 0.0
    %331 = vmatprep.subr.mxu0 0.0
    %332 = vmatpush1.msra.mxu0 0.0
    %333 = vmatprep.mubr.f32.mxu0 0.0
    %v334 = vand.u32 %v121, 4294901760
    %v335 = vsub.f32 %v121, %v334
    %336 = vmatmul.mubr.f32.gmra.mrb[0].mxu0 %v335
    %v337 = vpop.f32.mrb[0].mxu0
    %v338 = vadd.f32 %v266, %v337
    %v339 = vpop.f32.mrb[0].mxu0
    %340 = vdwg.mxu0
    %341 = vmatprep.subr.mxu0 0.0
    %342 = vmatpush1.msra.mxu0 1.0
    %343 = vmatprep.subr.mxu0 0.0
    %344 = vmatpush1.msra.mxu0 1.0
    %345 = vmatprep.subr.mxu0 0.0
    %346 = vmatpush1.msra.mxu0 1.0
    %347 = vmatprep.subr.mxu0 0.0
    %348 = vmatpush1.msra.mxu0 1.0
    %349 = vmatprep.subr.mxu0 0.0
    %350 = vmatpush1.msra.mxu0 0.0
    %351 = vmatprep.subr.mxu0 0.0
    %352 = vmatpush1.msra.mxu0 0.0
    %353 = vmatprep.subr.mxu0 0.0
    %354 = vmatpush1.msra.mxu0 0.0
    %355 = vmatprep.subr.mxu0 0.0
    %356 = vmatpush1.msra.mxu0 0.0
    %357 = vmatprep.subr.mxu0 0.0
    %358 = vmatpush1.msra.mxu0 0.0
    %359 = vmatprep.subr.mxu0 0.0
    %360 = vmatpush1.msra.mxu0 0.0
    %361 = vmatprep.subr.mxu0 0.0
    %362 = vmatpush1.msra.mxu0 0.0
    %363 = vmatprep.subr.mxu0 0.0
    %364 = vmatpush1.msra.mxu0 0.0
    %365 = vmatprep.subr.mxu0 0.0
    %366 = vmatpush1.msra.mxu0 0.0
    %367 = vmatprep.subr.mxu0 0.0
    %368 = vmatpush1.msra.mxu0 0.0
    %369 = vmatprep.subr.mxu0 0.0
    %370 = vmatpush1.msra.mxu0 0.0
    %371 = vmatprep.subr.mxu0 0.0
    %372 = vmatpush1.msra.mxu0 0.0
    %373 = vmatprep.subr.mxu0 0.0
    %374 = vmatpush1.msra.mxu0 0.0
    %375 = vmatprep.subr.mxu0 0.0
    %376 = vmatpush1.msra.mxu0 0.0
    %377 = vmatprep.subr.mxu0 0.0
    %378 = vmatpush1.msra.mxu0 0.0
    %379 = vmatprep.subr.mxu0 0.0
    %380 = vmatpush1.msra.mxu0 0.0
    %381 = vmatprep.subr.mxu0 0.0
    %382 = vmatpush1.msra.mxu0 0.0
    %383 = vmatprep.subr.mxu0 0.0
    %384 = vmatpush1.msra.mxu0 0.0
    %385 = vmatprep.subr.mxu0 0.0
    %386 = vmatpush1.msra.mxu0 0.0
    %387 = vmatprep.subr.mxu0 0.0
    %388 = vmatpush1.msra.mxu0 0.0
    %389 = vmatprep.subr.mxu0 0.0
    %390 = vmatpush1.msra.mxu0 0.0
    %391 = vmatprep.subr.mxu0 0.0
    %392 = vmatpush1.msra.mxu0 0.0
    %393 = vmatprep.subr.mxu0 0.0
    %394 = vmatpush1.msra.mxu0 0.0
    %395 = vmatprep.subr.mxu0 0.0
    %396 = vmatpush1.msra.mxu0 0.0
    %397 = vmatprep.subr.mxu0 0.0
    %398 = vmatpush1.msra.mxu0 0.0
    %399 = vmatprep.subr.mxu0 0.0
    %400 = vmatpush1.msra.mxu0 0.0
    %401 = vmatprep.subr.mxu0 0.0
    %402 = vmatpush1.msra.mxu0 0.0
    %403 = vmatprep.subr.mxu0 0.0
    %404 = vmatpush1.msra.mxu0 0.0
    %405 = vmatprep.mubr.f32.mxu0 0.0
    %v406 = vand.u32 %v121, 4294901760
    %v407 = vsub.f32 %v121, %v406
    %v408 = vand.u32 %v407, 4294901760
    %409 = vmatmul.mubr.f32.gmra.mrb[0].mxu0 %v408
    %v410 = vpop.f32.mrb[0].mxu0
    %v411 = vadd.f32 %v338, %v410
    %v412 = vpop.f32.mrb[0].mxu0
    %413 = vdwg.mxu0
    %414 = vmatprep.subr.mxu0 0.0
    %415 = vmatpush1.msra.mxu0 0.0
    %416 = vmatprep.subr.mxu0 0.0
    %417 = vmatpush1.msra.mxu0 0.0
    %418 = vmatprep.subr.mxu0 0.0
    %419 = vmatpush1.msra.mxu0 0.0
    %420 = vmatprep.subr.mxu0 0.0
    %421 = vmatpush1.msra.mxu0 0.0
    %422 = vmatprep.subr.mxu0 0.0
    %423 = vmatpush1.msra.mxu0 0.0
    %424 = vmatprep.subr.mxu0 0.0
    %425 = vmatpush1.msra.mxu0 0.0
    %426 = vmatprep.subr.mxu0 0.0
    %427 = vmatpush1.msra.mxu0 0.0
    %428 = vmatprep.subr.mxu0 0.0
    %429 = vmatpush1.msra.mxu0 0.0
    %430 = vmatprep.subr.mxu0 0.0
    %431 = vmatpush1.msra.mxu0 0.0
    %432 = vmatprep.subr.mxu0 0.0
    %433 = vmatpush1.msra.mxu0 0.0
    %434 = vmatprep.subr.mxu0 0.0
    %435 = vmatpush1.msra.mxu0 0.0
    %436 = vmatprep.subr.mxu0 0.0
    %437 = vmatpush1.msra.mxu0 0.0
    %438 = vmatprep.subr.mxu0 0.0
    %439 = vmatpush1.msra.mxu0 0.0
    %440 = vmatprep.subr.mxu0 0.0
    %441 = vmatpush1.msra.mxu0 0.0
    %442 = vmatprep.subr.mxu0 0.0
    %443 = vmatpush1.msra.mxu0 0.0
    %444 = vmatprep.subr.mxu0 0.0
    %445 = vmatpush1.msra.mxu0 0.0
    %446 = vmatprep.subr.mxu0 0.0
    %447 = vmatpush1.msra.mxu0 0.0
    %448 = vmatprep.subr.mxu0 0.0
    %449 = vmatpush1.msra.mxu0 0.0
    %450 = vmatprep.subr.mxu0 0.0
    %451 = vmatpush1.msra.mxu0 0.0
    %452 = vmatprep.subr.mxu0 0.0
    %453 = vmatpush1.msra.mxu0 0.0
    %454 = vmatprep.subr.mxu0 0.0
    %455 = vmatpush1.msra.mxu0 0.0
    %456 = vmatprep.subr.mxu0 0.0
    %457 = vmatpush1.msra.mxu0 0.0
    %458 = vmatprep.subr.mxu0 0.0
    %459 = vmatpush1.msra.mxu0 0.0
    %460 = vmatprep.subr.mxu0 0.0
    %461 = vmatpush1.msra.mxu0 0.0
    %462 = vmatprep.subr.mxu0 0.0
    %463 = vmatpush1.msra.mxu0 0.0
    %464 = vmatprep.subr.mxu0 0.0
    %465 = vmatpush1.msra.mxu0 0.0
    %466 = vmatprep.subr.mxu0 0.0
    %467 = vmatpush1.msra.mxu0 0.0
    %468 = vmatprep.subr.mxu0 0.0
    %469 = vmatpush1.msra.mxu0 0.0
    %470 = vmatprep.subr.mxu0 0.0
    %471 = vmatpush1.msra.mxu0 0.0
    %472 = vmatprep.subr.mxu0 0.0
    %473 = vmatpush1.msra.mxu0 0.0
    %474 = vmatprep.subr.mxu0 0.0
    %475 = vmatpush1.msra.mxu0 0.0
    %476 = vmatprep.subr.mxu0 0.0
    %477 = vmatpush1.msra.mxu0 0.0
    %478 = vmatprep.mubr.f32.mxu0 0.0
    %v479 = vand.u32 %v121, 4294901760
    %480 = vmatmul.mubr.f32.gmra.mrb[0].mxu0 %v479
    %v481 = vpop.f32.mrb[0].mxu0
    %v482 = vadd.f32 %v411, %v481
    %v483 = vpop.f32.mrb[0].mxu0
    %484 = vdwg.mxu0
    %485 = vmatprep.subr.mxu0 0.0
    %486 = vmatpush1.msra.mxu0 1.0
    %487 = vmatprep.subr.mxu0 0.0
    %488 = vmatpush1.msra.mxu0 1.0
    %489 = vmatprep.subr.mxu0 0.0
    %490 = vmatpush1.msra.mxu0 1.0
    %491 = vmatprep.subr.mxu0 0.0
    %492 = vmatpush1.msra.mxu0 1.0
    %493 = vmatprep.subr.mxu0 0.0
    %494 = vmatpush1.msra.mxu0 0.0
    %495 = vmatprep.subr.mxu0 0.0
    %496 = vmatpush1.msra.mxu0 0.0
    %497 = vmatprep.subr.mxu0 0.0
    %498 = vmatpush1.msra.mxu0 0.0
    %499 = vmatprep.subr.mxu0 0.0
    %500 = vmatpush1.msra.mxu0 0.0
    %501 = vmatprep.subr.mxu0 0.0
    %502 = vmatpush1.msra.mxu0 0.0
    %503 = vmatprep.subr.mxu0 0.0
    %504 = vmatpush1.msra.mxu0 0.0
    %505 = vmatprep.subr.mxu0 0.0
    %506 = vmatpush1.msra.mxu0 0.0
    %507 = vmatprep.subr.mxu0 0.0
    %508 = vmatpush1.msra.mxu0 0.0
    %509 = vmatprep.subr.mxu0 0.0
    %510 = vmatpush1.msra.mxu0 0.0
    %511 = vmatprep.subr.mxu0 0.0
    %512 = vmatpush1.msra.mxu0 0.0
    %513 = vmatprep.subr.mxu0 0.0
    %514 = vmatpush1.msra.mxu0 0.0
    %515 = vmatprep.subr.mxu0 0.0
    %516 = vmatpush1.msra.mxu0 0.0
    %517 = vmatprep.subr.mxu0 0.0
    %518 = vmatpush1.msra.mxu0 0.0
    %519 = vmatprep.subr.mxu0 0.0
    %520 = vmatpush1.msra.mxu0 0.0
    %521 = vmatprep.subr.mxu0 0.0
    %522 = vmatpush1.msra.mxu0 0.0
    %523 = vmatprep.subr.mxu0 0.0
    %524 = vmatpush1.msra.mxu0 0.0
    %525 = vmatprep.subr.mxu0 0.0
    %526 = vmatpush1.msra.mxu0 0.0
    %527 = vmatprep.subr.mxu0 0.0
    %528 = vmatpush1.msra.mxu0 0.0
    %529 = vmatprep.subr.mxu0 0.0
    %530 = vmatpush1.msra.mxu0 0.0
    %531 = vmatprep.subr.mxu0 0.0
    %532 = vmatpush1.msra.mxu0 0.0
    %533 = vmatprep.subr.mxu0 0.0
    %534 = vmatpush1.msra.mxu0 0.0
    %535 = vmatprep.subr.mxu0 0.0
    %536 = vmatpush1.msra.mxu0 0.0
    %537 = vmatprep.subr.mxu0 0.0
    %538 = vmatpush1.msra.mxu0 0.0
    %539 = vmatprep.subr.mxu0 0.0
    %540 = vmatpush1.msra.mxu0 0.0
    %541 = vmatprep.subr.mxu0 0.0
    %542 = vmatpush1.msra.mxu0 0.0
    %543 = vmatprep.subr.mxu0 0.0
    %544 = vmatpush1.msra.mxu0 0.0
    %545 = vmatprep.subr.mxu0 0.0
    %546 = vmatpush1.msra.mxu0 0.0
    %547 = vmatprep.subr.mxu0 0.0
    %548 = vmatpush1.msra.mxu0 0.0
    %549 = vmatprep.mubr.f32.mxu0 0.0
    %v550 = vand.u32 %v121, 4294901760
    %551 = vmatmul.mubr.f32.gmra.mrb[0].mxu0 %v550
    %v552 = vpop.f32.mrb[0].mxu0
    %v553 = vadd.f32 %v482, %v552
    %v554 = vpop.f32.mrb[0].mxu0
    %555 = vdwg.mxu0
    %v556 = vmul.f32 %v553, 0.03125
    %v557 = vsub.f32 %v117, %v556
    %v558 = vmul.f32 %v557, %v557
    %v560 = vsel %vm46, %v558, 0
    %562 = vmatprep.subr.mxu0 0.0
    %563 = vmatpush1.msra.mxu0 1.0
    %564 = vmatprep.subr.mxu0 0.0
    %565 = vmatpush1.msra.mxu0 1.0
    %566 = vmatprep.subr.mxu0 0.0
    %567 = vmatpush1.msra.mxu0 1.0
    %568 = vmatprep.subr.mxu0 0.0
    %569 = vmatpush1.msra.mxu0 1.0
    %570 = vmatprep.subr.mxu0 0.0
    %571 = vmatpush1.msra.mxu0 0.0
    %572 = vmatprep.subr.mxu0 0.0
    %573 = vmatpush1.msra.mxu0 0.0
    %574 = vmatprep.subr.mxu0 0.0
    %575 = vmatpush1.msra.mxu0 0.0
    %576 = vmatprep.subr.mxu0 0.0
    %577 = vmatpush1.msra.mxu0 0.0
    %578 = vmatprep.subr.mxu0 0.0
    %579 = vmatpush1.msra.mxu0 0.0
    %580 = vmatprep.subr.mxu0 0.0
    %581 = vmatpush1.msra.mxu0 0.0
    %582 = vmatprep.subr.mxu0 0.0
    %583 = vmatpush1.msra.mxu0 0.0
    %584 = vmatprep.subr.mxu0 0.0
    %585 = vmatpush1.msra.mxu0 0.0
    %586 = vmatprep.subr.mxu0 0.0
    %587 = vmatpush1.msra.mxu0 0.0
    %588 = vmatprep.subr.mxu0 0.0
    %589 = vmatpush1.msra.mxu0 0.0
    %590 = vmatprep.subr.mxu0 0.0
    %591 = vmatpush1.msra.mxu0 0.0
    %592 = vmatprep.subr.mxu0 0.0
    %593 = vmatpush1.msra.mxu0 0.0
    %594 = vmatprep.subr.mxu0 0.0
    %595 = vmatpush1.msra.mxu0 0.0
    %596 = vmatprep.subr.mxu0 0.0
    %597 = vmatpush1.msra.mxu0 0.0
    %598 = vmatprep.subr.mxu0 0.0
    %599 = vmatpush1.msra.mxu0 0.0
    %600 = vmatprep.subr.mxu0 0.0
    %601 = vmatpush1.msra.mxu0 0.0
    %602 = vmatprep.subr.mxu0 0.0
    %603 = vmatpush1.msra.mxu0 0.0
    %604 = vmatprep.subr.mxu0 0.0
    %605 = vmatpush1.msra.mxu0 0.0
    %606 = vmatprep.subr.mxu0 0.0
    %607 = vmatpush1.msra.mxu0 0.0
    %608 = vmatprep.subr.mxu0 0.0
    %609 = vmatpush1.msra.mxu0 0.0
    %610 = vmatprep.subr.mxu0 0.0
    %611 = vmatpush1.msra.mxu0 0.0
    %612 = vmatprep.subr.mxu0 0.0
    %613 = vmatpush1.msra.mxu0 0.0
    %614 = vmatprep.subr.mxu0 0.0
    %615 = vmatpush1.msra.mxu0 0.0
    %616 = vmatprep.subr.mxu0 0.0
    %617 = vmatpush1.msra.mxu0 0.0
    %618 = vmatprep.subr.mxu0 0.0
    %619 = vmatpush1.msra.mxu0 0.0
    %620 = vmatprep.subr.mxu0 0.0
    %621 = vmatpush1.msra.mxu0 0.0
    %622 = vmatprep.subr.mxu0 0.0
    %623 = vmatpush1.msra.mxu0 0.0
    %624 = vmatprep.subr.mxu0 0.0
    %625 = vmatpush1.msra.mxu0 0.0
    %626 = vmatprep.mubr.f32.mxu0 0.0
    %v627 = vand.u32 %v560, 4294901760
    %v628 = vsub.f32 %v560, %v627
    %v629 = vand.u32 %v628, 4294901760
    %v630 = vsub.f32 %v628, %v629
    %v631 = vand.u32 %v630, 4294901760
    %632 = vmatmul.mubr.f32.gmra.mrb[0].mxu0 %v631
    %v633 = vpop.f32.mrb[0].mxu0
    %v634 = vadd.f32 0.0, %v633
    %v635 = vpop.f32.mrb[0].mxu0
    %636 = vdwg.mxu0
    %637 = vmatprep.subr.mxu0 0.0
    %638 = vmatpush1.msra.mxu0 0.0
    %639 = vmatprep.subr.mxu0 0.0
    %640 = vmatpush1.msra.mxu0 0.0
    %641 = vmatprep.subr.mxu0 0.0
    %642 = vmatpush1.msra.mxu0 0.0
    %643 = vmatprep.subr.mxu0 0.0
    %644 = vmatpush1.msra.mxu0 0.0
    %645 = vmatprep.subr.mxu0 0.0
    %646 = vmatpush1.msra.mxu0 0.0
    %647 = vmatprep.subr.mxu0 0.0
    %648 = vmatpush1.msra.mxu0 0.0
    %649 = vmatprep.subr.mxu0 0.0
    %650 = vmatpush1.msra.mxu0 0.0
    %651 = vmatprep.subr.mxu0 0.0
    %652 = vmatpush1.msra.mxu0 0.0
    %653 = vmatprep.subr.mxu0 0.0
    %654 = vmatpush1.msra.mxu0 0.0
    %655 = vmatprep.subr.mxu0 0.0
    %656 = vmatpush1.msra.mxu0 0.0
    %657 = vmatprep.subr.mxu0 0.0
    %658 = vmatpush1.msra.mxu0 0.0
    %659 = vmatprep.subr.mxu0 0.0
    %660 = vmatpush1.msra.mxu0 0.0
    %661 = vmatprep.subr.mxu0 0.0
    %662 = vmatpush1.msra.mxu0 0.0
    %663 = vmatprep.subr.mxu0 0.0
    %664 = vmatpush1.msra.mxu0 0.0
    %665 = vmatprep.subr.mxu0 0.0
    %666 = vmatpush1.msra.mxu0 0.0
    %667 = vmatprep.subr.mxu0 0.0
    %668 = vmatpush1.msra.mxu0 0.0
    %669 = vmatprep.subr.mxu0 0.0
    %670 = vmatpush1.msra.mxu0 0.0
    %671 = vmatprep.subr.mxu0 0.0
    %672 = vmatpush1.msra.mxu0 0.0
    %673 = vmatprep.subr.mxu0 0.0
    %674 = vmatpush1.msra.mxu0 0.0
    %675 = vmatprep.subr.mxu0 0.0
    %676 = vmatpush1.msra.mxu0 0.0
    %677 = vmatprep.subr.mxu0 0.0
    %678 = vmatpush1.msra.mxu0 0.0
    %679 = vmatprep.subr.mxu0 0.0
    %680 = vmatpush1.msra.mxu0 0.0
    %681 = vmatprep.subr.mxu0 0.0
    %682 = vmatpush1.msra.mxu0 0.0
    %683 = vmatprep.subr.mxu0 0.0
    %684 = vmatpush1.msra.mxu0 0.0
    %685 = vmatprep.subr.mxu0 0.0
    %686 = vmatpush1.msra.mxu0 0.0
    %687 = vmatprep.subr.mxu0 0.0
    %688 = vmatpush1.msra.mxu0 0.0
    %689 = vmatprep.subr.mxu0 0.0
    %690 = vmatpush1.msra.mxu0 0.0
    %691 = vmatprep.subr.mxu0 0.0
    %692 = vmatpush1.msra.mxu0 0.0
    %693 = vmatprep.subr.mxu0 0.0
    %694 = vmatpush1.msra.mxu0 0.0
    %695 = vmatprep.subr.mxu0 0.0
    %696 = vmatpush1.msra.mxu0 0.0
    %697 = vmatprep.subr.mxu0 0.0
    %698 = vmatpush1.msra.mxu0 0.0
    %699 = vmatprep.subr.mxu0 0.0
    %700 = vmatpush1.msra.mxu0 0.0
    %701 = vmatprep.mubr.f32.mxu0 0.0
    %v702 = vand.u32 %v560, 4294901760
    %703 = vmatmul.mubr.f32.gmra.mrb[0].mxu0 %v702
    %v704 = vpop.f32.mrb[0].mxu0
    %v705 = vadd.f32 %v634, %v704
    %v706 = vpop.f32.mrb[0].mxu0
    %707 = vdwg.mxu0
    %708 = vmatprep.subr.mxu0 0.0
    %709 = vmatpush1.msra.mxu0 0.0
    %710 = vmatprep.subr.mxu0 0.0
    %711 = vmatpush1.msra.mxu0 0.0
    %712 = vmatprep.subr.mxu0 0.0
    %713 = vmatpush1.msra.mxu0 0.0
    %714 = vmatprep.subr.mxu0 0.0
    %715 = vmatpush1.msra.mxu0 0.0
    %716 = vmatprep.subr.mxu0 0.0
    %717 = vmatpush1.msra.mxu0 0.0
    %718 = vmatprep.subr.mxu0 0.0
    %719 = vmatpush1.msra.mxu0 0.0
    %720 = vmatprep.subr.mxu0 0.0
    %721 = vmatpush1.msra.mxu0 0.0
    %722 = vmatprep.subr.mxu0 0.0
    %723 = vmatpush1.msra.mxu0 0.0
    %724 = vmatprep.subr.mxu0 0.0
    %725 = vmatpush1.msra.mxu0 0.0
    %726 = vmatprep.subr.mxu0 0.0
    %727 = vmatpush1.msra.mxu0 0.0
    %728 = vmatprep.subr.mxu0 0.0
    %729 = vmatpush1.msra.mxu0 0.0
    %730 = vmatprep.subr.mxu0 0.0
    %731 = vmatpush1.msra.mxu0 0.0
    %732 = vmatprep.subr.mxu0 0.0
    %733 = vmatpush1.msra.mxu0 0.0
    %734 = vmatprep.subr.mxu0 0.0
    %735 = vmatpush1.msra.mxu0 0.0
    %736 = vmatprep.subr.mxu0 0.0
    %737 = vmatpush1.msra.mxu0 0.0
    %738 = vmatprep.subr.mxu0 0.0
    %739 = vmatpush1.msra.mxu0 0.0
    %740 = vmatprep.subr.mxu0 0.0
    %741 = vmatpush1.msra.mxu0 0.0
    %742 = vmatprep.subr.mxu0 0.0
    %743 = vmatpush1.msra.mxu0 0.0
    %744 = vmatprep.subr.mxu0 0.0
    %745 = vmatpush1.msra.mxu0 0.0
    %746 = vmatprep.subr.mxu0 0.0
    %747 = vmatpush1.msra.mxu0 0.0
    %748 = vmatprep.subr.mxu0 0.0
    %749 = vmatpush1.msra.mxu0 0.0
    %750 = vmatprep.subr.mxu0 0.0
    %751 = vmatpush1.msra.mxu0 0.0
    %752 = vmatprep.subr.mxu0 0.0
    %753 = vmatpush1.msra.mxu0 0.0
    %754 = vmatprep.subr.mxu0 0.0
    %755 = vmatpush1.msra.mxu0 0.0
    %756 = vmatprep.subr.mxu0 0.0
    %757 = vmatpush1.msra.mxu0 0.0
    %758 = vmatprep.subr.mxu0 0.0
    %759 = vmatpush1.msra.mxu0 0.0
    %760 = vmatprep.subr.mxu0 0.0
    %761 = vmatpush1.msra.mxu0 0.0
    %762 = vmatprep.subr.mxu0 0.0
    %763 = vmatpush1.msra.mxu0 0.0
    %764 = vmatprep.subr.mxu0 0.0
    %765 = vmatpush1.msra.mxu0 0.0
    %766 = vmatprep.subr.mxu0 0.0
    %767 = vmatpush1.msra.mxu0 0.0
    %768 = vmatprep.subr.mxu0 0.0
    %769 = vmatpush1.msra.mxu0 0.0
    %770 = vmatprep.subr.mxu0 0.0
    %771 = vmatpush1.msra.mxu0 0.0
    %772 = vmatprep.mubr.f32.mxu0 0.0
    %v773 = vand.u32 %v560, 4294901760
    %v774 = vsub.f32 %v560, %v773
    %775 = vmatmul.mubr.f32.gmra.mrb[0].mxu0 %v774
    %v776 = vpop.f32.mrb[0].mxu0
    %v777 = vadd.f32 %v705, %v776
    %v778 = vpop.f32.mrb[0].mxu0
    %779 = vdwg.mxu0
    %780 = vmatprep.subr.mxu0 0.0
    %781 = vmatpush1.msra.mxu0 1.0
    %782 = vmatprep.subr.mxu0 0.0
    %783 = vmatpush1.msra.mxu0 1.0
    %784 = vmatprep.subr.mxu0 0.0
    %785 = vmatpush1.msra.mxu0 1.0
    %786 = vmatprep.subr.mxu0 0.0
    %787 = vmatpush1.msra.mxu0 1.0
    %788 = vmatprep.subr.mxu0 0.0
    %789 = vmatpush1.msra.mxu0 0.0
    %790 = vmatprep.subr.mxu0 0.0
    %791 = vmatpush1.msra.mxu0 0.0
    %792 = vmatprep.subr.mxu0 0.0
    %793 = vmatpush1.msra.mxu0 0.0
    %794 = vmatprep.subr.mxu0 0.0
    %795 = vmatpush1.msra.mxu0 0.0
    %796 = vmatprep.subr.mxu0 0.0
    %797 = vmatpush1.msra.mxu0 0.0
    %798 = vmatprep.subr.mxu0 0.0
    %799 = vmatpush1.msra.mxu0 0.0
    %800 = vmatprep.subr.mxu0 0.0
    %801 = vmatpush1.msra.mxu0 0.0
    %802 = vmatprep.subr.mxu0 0.0
    %803 = vmatpush1.msra.mxu0 0.0
    %804 = vmatprep.subr.mxu0 0.0
    %805 = vmatpush1.msra.mxu0 0.0
    %806 = vmatprep.subr.mxu0 0.0
    %807 = vmatpush1.msra.mxu0 0.0
    %808 = vmatprep.subr.mxu0 0.0
    %809 = vmatpush1.msra.mxu0 0.0
    %810 = vmatprep.subr.mxu0 0.0
    %811 = vmatpush1.msra.mxu0 0.0
    %812 = vmatprep.subr.mxu0 0.0
    %813 = vmatpush1.msra.mxu0 0.0
    %814 = vmatprep.subr.mxu0 0.0
    %815 = vmatpush1.msra.mxu0 0.0
    %816 = vmatprep.subr.mxu0 0.0
    %817 = vmatpush1.msra.mxu0 0.0
    %818 = vmatprep.subr.mxu0 0.0
    %819 = vmatpush1.msra.mxu0 0.0
    %820 = vmatprep.subr.mxu0 0.0
    %821 = vmatpush1.msra.mxu0 0.0
    %822 = vmatprep.subr.mxu0 0.0
    %823 = vmatpush1.msra.mxu0 0.0
    %824 = vmatprep.subr.mxu0 0.0
    %825 = vmatpush1.msra.mxu0 0.0
    %826 = vmatprep.subr.mxu0 0.0
    %827 = vmatpush1.msra.mxu0 0.0
    %828 = vmatprep.subr.mxu0 0.0
    %829 = vmatpush1.msra.mxu0 0.0
    %830 = vmatprep.subr.mxu0 0.0
    %831 = vmatpush1.msra.mxu0 0.0
    %832 = vmatprep.subr.mxu0 0.0
    %833 = vmatpush1.msra.mxu0 0.0
    %834 = vmatprep.subr.mxu0 0.0
    %835 = vmatpush1.msra.mxu0 0.0
    %836 = vmatprep.subr.mxu0 0.0
    %837 = vmatpush1.msra.mxu0 0.0
    %838 = vmatprep.subr.mxu0 0.0
    %839 = vmatpush1.msra.mxu0 0.0
    %840 = vmatprep.subr.mxu0 0.0
    %841 = vmatpush1.msra.mxu0 0.0
    %842 = vmatprep.subr.mxu0 0.0
    %843 = vmatpush1.msra.mxu0 0.0
    %844 = vmatprep.mubr.f32.mxu0 0.0
    %v845 = vand.u32 %v560, 4294901760
    %v846 = vsub.f32 %v560, %v845
    %v847 = vand.u32 %v846, 4294901760
    %848 = vmatmul.mubr.f32.gmra.mrb[0].mxu0 %v847
    %v849 = vpop.f32.mrb[0].mxu0
    %v850 = vadd.f32 %v777, %v849
    %v851 = vpop.f32.mrb[0].mxu0
    %852 = vdwg.mxu0
    %853 = vmatprep.subr.mxu0 0.0
    %854 = vmatpush1.msra.mxu0 0.0
    %855 = vmatprep.subr.mxu0 0.0
    %856 = vmatpush1.msra.mxu0 0.0
    %857 = vmatprep.subr.mxu0 0.0
    %858 = vmatpush1.msra.mxu0 0.0
    %859 = vmatprep.subr.mxu0 0.0
    %860 = vmatpush1.msra.mxu0 0.0
    %861 = vmatprep.subr.mxu0 0.0
    %862 = vmatpush1.msra.mxu0 0.0
    %863 = vmatprep.subr.mxu0 0.0
    %864 = vmatpush1.msra.mxu0 0.0
    %865 = vmatprep.subr.mxu0 0.0
    %866 = vmatpush1.msra.mxu0 0.0
    %867 = vmatprep.subr.mxu0 0.0
    %868 = vmatpush1.msra.mxu0 0.0
    %869 = vmatprep.subr.mxu0 0.0
    %870 = vmatpush1.msra.mxu0 0.0
    %871 = vmatprep.subr.mxu0 0.0
    %872 = vmatpush1.msra.mxu0 0.0
    %873 = vmatprep.subr.mxu0 0.0
    %874 = vmatpush1.msra.mxu0 0.0
    %875 = vmatprep.subr.mxu0 0.0
    %876 = vmatpush1.msra.mxu0 0.0
    %877 = vmatprep.subr.mxu0 0.0
    %878 = vmatpush1.msra.mxu0 0.0
    %879 = vmatprep.subr.mxu0 0.0
    %880 = vmatpush1.msra.mxu0 0.0
    %881 = vmatprep.subr.mxu0 0.0
    %882 = vmatpush1.msra.mxu0 0.0
    %883 = vmatprep.subr.mxu0 0.0
    %884 = vmatpush1.msra.mxu0 0.0
    %885 = vmatprep.subr.mxu0 0.0
    %886 = vmatpush1.msra.mxu0 0.0
    %887 = vmatprep.subr.mxu0 0.0
    %888 = vmatpush1.msra.mxu0 0.0
    %889 = vmatprep.subr.mxu0 0.0
    %890 = vmatpush1.msra.mxu0 0.0
    %891 = vmatprep.subr.mxu0 0.0
    %892 = vmatpush1.msra.mxu0 0.0
    %893 = vmatprep.subr.mxu0 0.0
    %894 = vmatpush1.msra.mxu0 0.0
    %895 = vmatprep.subr.mxu0 0.0
    %896 = vmatpush1.msra.mxu0 0.0
    %897 = vmatprep.subr.mxu0 0.0
    %898 = vmatpush1.msra.mxu0 0.0
    %899 = vmatprep.subr.mxu0 0.0
    %900 = vmatpush1.msra.mxu0 0.0
    %901 = vmatprep.subr.mxu0 0.0
    %902 = vmatpush1.msra.mxu0 0.0
    %903 = vmatprep.subr.mxu0 0.0
    %904 = vmatpush1.msra.mxu0 0.0
    %905 = vmatprep.subr.mxu0 0.0
    %906 = vmatpush1.msra.mxu0 0.0
    %907 = vmatprep.subr.mxu0 0.0
    %908 = vmatpush1.msra.mxu0 0.0
    %909 = vmatprep.subr.mxu0 0.0
    %910 = vmatpush1.msra.mxu0 0.0
    %911 = vmatprep.subr.mxu0 0.0
    %912 = vmatpush1.msra.mxu0 0.0
    %913 = vmatprep.subr.mxu0 0.0
    %914 = vmatpush1.msra.mxu0 0.0
    %915 = vmatprep.subr.mxu0 0.0
    %916 = vmatpush1.msra.mxu0 0.0
    %917 = vmatprep.mubr.f32.mxu0 0.0
    %v918 = vand.u32 %v560, 4294901760
    %919 = vmatmul.mubr.f32.gmra.mrb[0].mxu0 %v918
    %v920 = vpop.f32.mrb[0].mxu0
    %v921 = vadd.f32 %v850, %v920
    %v922 = vpop.f32.mrb[0].mxu0
    %923 = vdwg.mxu0
    %924 = vmatprep.subr.mxu0 0.0
    %925 = vmatpush1.msra.mxu0 1.0
    %926 = vmatprep.subr.mxu0 0.0
    %927 = vmatpush1.msra.mxu0 1.0
    %928 = vmatprep.subr.mxu0 0.0
    %929 = vmatpush1.msra.mxu0 1.0
    %930 = vmatprep.subr.mxu0 0.0
    %931 = vmatpush1.msra.mxu0 1.0
    %932 = vmatprep.subr.mxu0 0.0
    %933 = vmatpush1.msra.mxu0 0.0
    %934 = vmatprep.subr.mxu0 0.0
    %935 = vmatpush1.msra.mxu0 0.0
    %936 = vmatprep.subr.mxu0 0.0
    %937 = vmatpush1.msra.mxu0 0.0
    %938 = vmatprep.subr.mxu0 0.0
    %939 = vmatpush1.msra.mxu0 0.0
    %940 = vmatprep.subr.mxu0 0.0
    %941 = vmatpush1.msra.mxu0 0.0
    %942 = vmatprep.subr.mxu0 0.0
    %943 = vmatpush1.msra.mxu0 0.0
    %944 = vmatprep.subr.mxu0 0.0
    %945 = vmatpush1.msra.mxu0 0.0
    %946 = vmatprep.subr.mxu0 0.0
    %947 = vmatpush1.msra.mxu0 0.0
    %948 = vmatprep.subr.mxu0 0.0
    %949 = vmatpush1.msra.mxu0 0.0
    %950 = vmatprep.subr.mxu0 0.0
    %951 = vmatpush1.msra.mxu0 0.0
    %952 = vmatprep.subr.mxu0 0.0
    %953 = vmatpush1.msra.mxu0 0.0
    %954 = vmatprep.subr.mxu0 0.0
    %955 = vmatpush1.msra.mxu0 0.0
    %956 = vmatprep.subr.mxu0 0.0
    %957 = vmatpush1.msra.mxu0 0.0
    %958 = vmatprep.subr.mxu0 0.0
    %959 = vmatpush1.msra.mxu0 0.0
    %960 = vmatprep.subr.mxu0 0.0
    %961 = vmatpush1.msra.mxu0 0.0
    %962 = vmatprep.subr.mxu0 0.0
    %963 = vmatpush1.msra.mxu0 0.0
    %964 = vmatprep.subr.mxu0 0.0
    %965 = vmatpush1.msra.mxu0 0.0
    %966 = vmatprep.subr.mxu0 0.0
    %967 = vmatpush1.msra.mxu0 0.0
    %968 = vmatprep.subr.mxu0 0.0
    %969 = vmatpush1.msra.mxu0 0.0
    %970 = vmatprep.subr.mxu0 0.0
    %971 = vmatpush1.msra.mxu0 0.0
    %972 = vmatprep.subr.mxu0 0.0
    %973 = vmatpush1.msra.mxu0 0.0
    %974 = vmatprep.subr.mxu0 0.0
    %975 = vmatpush1.msra.mxu0 0.0
    %976 = vmatprep.subr.mxu0 0.0
    %977 = vmatpush1.msra.mxu0 0.0
    %978 = vmatprep.subr.mxu0 0.0
    %979 = vmatpush1.msra.mxu0 0.0
    %980 = vmatprep.subr.mxu0 0.0
    %981 = vmatpush1.msra.mxu0 0.0
    %982 = vmatprep.subr.mxu0 0.0
    %983 = vmatpush1.msra.mxu0 0.0
    %984 = vmatprep.subr.mxu0 0.0
    %985 = vmatpush1.msra.mxu0 0.0
    %986 = vmatprep.subr.mxu0 0.0
    %987 = vmatpush1.msra.mxu0 0.0
    %988 = vmatprep.mubr.f32.mxu0 0.0
    %v989 = vand.u32 %v560, 4294901760
    %990 = vmatmul.mubr.f32.gmra.mrb[0].mxu0 %v989
    %v991 = vpop.f32.mrb[0].mxu0
    %v992 = vadd.f32 %v921, %v991
    %v993 = vpop.f32.mrb[0].mxu0
    %994 = vdwg.mxu0
    %v995 = vmul.f32 %v992, 0.03125
    %v996 = vadd.f32 %v995, 1e-05
    %v997 = vrsqrt.pop %v996
    %v998 = vmul.f32 %v557, %v997
    %v999 = vlaneseq
    %v1000 = vshrl.u32 %v999, 7
    %v1001 = vsub.s32 1, %v1000
    %v1002 = vrot.slane %v41, %v1001
    %v1003 = vmul.f32 %v998, %v1002
    %v1004 = vlaneseq
    %v1005 = vshrl.u32 %v1004, 7
    %v1006 = vsub.s32 2, %v1005
    %v1007 = vrot.slane %v41, %v1006
    %v1008 = vadd.f32 %v1003, %v1007
    %v1009 = vsel %vm46, %v1008, -inf
    %1010 = vmax.xlane.f32.xlu0 %v1009
    %v1011 = vpop.xlane.xlu0 %1010
    %v1012 = vsub.f32 %v1008, %v1011
    %v1013 = vmul.f32 %v1012, 1.442695
    %v1014 = vpow.pop %v1013
    %v1016 = vsel %vm46, %v1014, 0
    %1018 = vmatprep.subr.mxu0 0.0
    %1019 = vmatpush1.msra.mxu0 1.0
    %1020 = vmatprep.subr.mxu0 0.0
    %1021 = vmatpush1.msra.mxu0 1.0
    %1022 = vmatprep.subr.mxu0 0.0
    %1023 = vmatpush1.msra.mxu0 1.0
    %1024 = vmatprep.subr.mxu0 0.0
    %1025 = vmatpush1.msra.mxu0 1.0
    %1026 = vmatprep.subr.mxu0 0.0
    %1027 = vmatpush1.msra.mxu0 0.0
    %1028 = vmatprep.subr.mxu0 0.0
    %1029 = vmatpush1.msra.mxu0 0.0
    %1030 = vmatprep.subr.mxu0 0.0
    %1031 = vmatpush1.msra.mxu0 0.0
    %1032 = vmatprep.subr.mxu0 0.0
    %1033 = vmatpush1.msra.mxu0 0.0
    %1034 = vmatprep.subr.mxu0 0.0
    %1035 = vmatpush1.msra.mxu0 0.0
    %1036 = vmatprep.subr.mxu0 0.0
    %1037 = vmatpush1.msra.mxu0 0.0
    %1038 = vmatprep.subr.mxu0 0.0
    %1039 = vmatpush1.msra.mxu0 0.0
    %1040 = vmatprep.subr.mxu0 0.0
    %1041 = vmatpush1.msra.mxu0 0.0
    %1042 = vmatprep.subr.mxu0 0.0
    %1043 = vmatpush1.msra.mxu0 0.0
    %1044 = vmatprep.subr.mxu0 0.0
    %1045 = vmatpush1.msra.mxu0 0.0
    %1046 = vmatprep.subr.mxu0 0.0
    %1047 = vmatpush1.msra.mxu0 0.0
    %1048 = vmatprep.subr.mxu0 0.0
    %1049 = vmatpush1.msra.mxu0 0.0
    %1050 = vmatprep.subr.mxu0 0.0
    %1051 = vmatpush1.msra.mxu0 0.0
    %1052 = vmatprep.subr.mxu0 0.0
    %1053 = vmatpush1.msra.mxu0 0.0
    %1054 = vmatprep.subr.mxu0 0.0
    %1055 = vmatpush1.msra.mxu0 0.0
    %1056 = vmatprep.subr.mxu0 0.0
    %1057 = vmatpush1.msra.mxu0 0.0
    %1058 = vmatprep.subr.mxu0 0.0
    %1059 = vmatpush1.msra.mxu0 0.0
    %1060 = vmatprep.subr.mxu0 0.0
    %1061 = vmatpush1.msra.mxu0 0.0
    %1062 = vmatprep.subr.mxu0 0.0
    %1063 = vmatpush1.msra.mxu0 0.0
    %1064 = vmatprep.subr.mxu0 0.0
    %1065 = vmatpush1.msra.mxu0 0.0
    %1066 = vmatprep.subr.mxu0 0.0
    %1067 = vmatpush1.msra.mxu0 0.0
    %1068 = vmatprep.subr.mxu0 0.0
    %1069 = vmatpush1.msra.mxu0 0.0
    %1070 = vmatprep.subr.mxu0 0.0
    %1071 = vmatpush1.msra.mxu0 0.0
    %1072 = vmatprep.subr.mxu0 0.0
    %1073 = vmatpush1.msra.mxu0 0.0
    %1074 = vmatprep.subr.mxu0 0.0
    %1075 = vmatpush1.msra.mxu0 0.0
    %1076 = vmatprep.subr.mxu0 0.0
    %1077 = vmatpush1.msra.mxu0 0.0
    %1078 = vmatprep.subr.mxu0 0.0
    %1079 = vmatpush1.msra.mxu0 0.0
    %1080 = vmatprep.subr.mxu0 0.0
    %1081 = vmatpush1.msra.mxu0 0.0
    %1082 = vmatprep.mubr.f32.mxu0 0.0
    %v1083 = vand.u32 %v1016, 4294901760
    %v1084 = vsub.f32 %v1016, %v1083
    %v1085 = vand.u32 %v1084, 4294901760
    %v1086 = vsub.f32 %v1084, %v1085
    %v1087 = vand.u32 %v1086, 4294901760
    %1088 = vmatmul.mubr.f32.gmra.mrb[0].mxu0 %v1087
    %v1089 = vpop.f32.mrb[0].mxu0
    %v1090 = vadd.f32 0.0, %v1089
    %v1091 = vpop.f32.mrb[0].mxu0
    %1092 = vdwg.mxu0
    %1093 = vmatprep.subr.mxu0 0.0
    %1094 = vmatpush1.msra.mxu0 0.0
    %1095 = vmatprep.subr.mxu0 0.0
    %1096 = vmatpush1.msra.mxu0 0.0
    %1097 = vmatprep.subr.mxu0 0.0
    %1098 = vmatpush1.msra.mxu0 0.0
    %1099 = vmatprep.subr.mxu0 0.0
    %1100 = vmatpush1.msra.mxu0 0.0
    %1101 = vmatprep.subr.mxu0 0.0
    %1102 = vmatpush1.msra.mxu0 0.0
    %1103 = vmatprep.subr.mxu0 0.0
    %1104 = vmatpush1.msra.mxu0 0.0
    %1105 = vmatprep.subr.mxu0 0.0
    %1106 = vmatpush1.msra.mxu0 0.0
    %1107 = vmatprep.subr.mxu0 0.0
    %1108 = vmatpush1.msra.mxu0 0.0
    %1109 = vmatprep.subr.mxu0 0.0
    %1110 = vmatpush1.msra.mxu0 0.0
    %1111 = vmatprep.subr.mxu0 0.0
    %1112 = vmatpush1.msra.mxu0 0.0
    %1113 = vmatprep.subr.mxu0 0.0
    %1114 = vmatpush1.msra.mxu0 0.0
    %1115 = vmatprep.subr.mxu0 0.0
    %1116 = vmatpush1.msra.mxu0 0.0
    %1117 = vmatprep.subr.mxu0 0.0
    %1118 = vmatpush1.msra.mxu0 0.0
    %1119 = vmatprep.subr.mxu0 0.0
    %1120 = vmatpush1.msra.mxu0 0.0
    %1121 = vmatprep.subr.mxu0 0.0
    %1122 = vmatpush1.msra.mxu0 0.0
    %1123 = vmatprep.subr.mxu0 0.0
    %1124 = vmatpush1.msra.mxu0 0.0
    %1125 = vmatprep.subr.mxu0 0.0
    %1126 = vmatpush1.msra.mxu0 0.0
    %1127 = vmatprep.subr.mxu0 0.0
    %1128 = vmatpush1.msra.mxu0 0.0
    %1129 = vmatprep.subr.mxu0 0.0
    %1130 = vmatpush1.msra.mxu0 0.0
    %1131 = vmatprep.subr.mxu0 0.0
    %1132 = vmatpush1.msra.mxu0 0.0
    %1133 = vmatprep.subr.mxu0 0.0
    %1134 = vmatpush1.msra.mxu0 0.0
    %1135 = vmatprep.subr.mxu0 0.0
    %1136 = vmatpush1.msra.mxu0 0.0
    %1137 = vmatprep.subr.mxu0 0.0
    %1138 = vmatpush1.msra.mxu0 0.0
    %1139 = vmatprep.subr.mxu0 0.0
    %1140 = vmatpush1.msra.mxu0 0.0
    %1141 = vmatprep.subr.mxu0 0.0
    %1142 = vmatpush1.msra.mxu0 0.0
    %1143 = vmatprep.subr.mxu0 0.0
    %1144 = vmatpush1.msra.mxu0 0.0
    %1145 = vmatprep.subr.mxu0 0.0
    %1146 = vmatpush1.msra.mxu0 0.0
    %1147 = vmatprep.subr.mxu0 0.0
    %1148 = vmatpush1.msra.mxu0 0.0
    %1149 = vmatprep.subr.mxu0 0.0
    %1150 = vmatpush1.msra.mxu0 0.0
    %1151 = vmatprep.subr.mxu0 0.0
    %1152 = vmatpush1.msra.mxu0 0.0
    %1153 = vmatprep.subr.mxu0 0.0
    %1154 = vmatpush1.msra.mxu0 0.0
    %1155 = vmatprep.subr.mxu0 0.0
    %1156 = vmatpush1.msra.mxu0 0.0
    %1157 = vmatprep.mubr.f32.mxu0 0.0
    %v1158 = vand.u32 %v1016, 4294901760
    %1159 = vmatmul.mubr.f32.gmra.mrb[0].mxu0 %v1158
    %v1160 = vpop.f32.mrb[0].mxu0
    %v1161 = vadd.f32 %v1090, %v1160
    %v1162 = vpop.f32.mrb[0].mxu0
    %1163 = vdwg.mxu0
    %1164 = vmatprep.subr.mxu0 0.0
    %1165 = vmatpush1.msra.mxu0 0.0
    %1166 = vmatprep.subr.mxu0 0.0
    %1167 = vmatpush1.msra.mxu0 0.0
    %1168 = vmatprep.subr.mxu0 0.0
    %1169 = vmatpush1.msra.mxu0 0.0
    %1170 = vmatprep.subr.mxu0 0.0
    %1171 = vmatpush1.msra.mxu0 0.0
    %1172 = vmatprep.subr.mxu0 0.0
    %1173 = vmatpush1.msra.mxu0 0.0
    %1174 = vmatprep.subr.mxu0 0.0
    %1175 = vmatpush1.msra.mxu0 0.0
    %1176 = vmatprep.subr.mxu0 0.0
    %1177 = vmatpush1.msra.mxu0 0.0
    %1178 = vmatprep.subr.mxu0 0.0
    %1179 = vmatpush1.msra.mxu0 0.0
    %1180 = vmatprep.subr.mxu0 0.0
    %1181 = vmatpush1.msra.mxu0 0.0
    %1182 = vmatprep.subr.mxu0 0.0
    %1183 = vmatpush1.msra.mxu0 0.0
    %1184 = vmatprep.subr.mxu0 0.0
    %1185 = vmatpush1.msra.mxu0 0.0
    %1186 = vmatprep.subr.mxu0 0.0
    %1187 = vmatpush1.msra.mxu0 0.0
    %1188 = vmatprep.subr.mxu0 0.0
    %1189 = vmatpush1.msra.mxu0 0.0
    %1190 = vmatprep.subr.mxu0 0.0
    %1191 = vmatpush1.msra.mxu0 0.0
    %1192 = vmatprep.subr.mxu0 0.0
    %1193 = vmatpush1.msra.mxu0 0.0
    %1194 = vmatprep.subr.mxu0 0.0
    %1195 = vmatpush1.msra.mxu0 0.0
    %1196 = vmatprep.subr.mxu0 0.0
    %1197 = vmatpush1.msra.mxu0 0.0
    %1198 = vmatprep.subr.mxu0 0.0
    %1199 = vmatpush1.msra.mxu0 0.0
    %1200 = vmatprep.subr.mxu0 0.0
    %1201 = vmatpush1.msra.mxu0 0.0
    %1202 = vmatprep.subr.mxu0 0.0
    %1203 = vmatpush1.msra.mxu0 0.0
    %1204 = vmatprep.subr.mxu0 0.0
    %1205 = vmatpush1.msra.mxu0 0.0
    %1206 = vmatprep.subr.mxu0 0.0
    %1207 = vmatpush1.msra.mxu0 0.0
    %1208 = vmatprep.subr.mxu0 0.0
    %1209 = vmatpush1.msra.mxu0 0.0
    %1210 = vmatprep.subr.mxu0 0.0
    %1211 = vmatpush1.msra.mxu0 0.0
    %1212 = vmatprep.subr.mxu0 0.0
    %1213 = vmatpush1.msra.mxu0 0.0
    %1214 = vmatprep.subr.mxu0 0.0
    %1215 = vmatpush1.msra.mxu0 0.0
    %1216 = vmatprep.subr.mxu0 0.0
    %1217 = vmatpush1.msra.mxu0 0.0
    %1218 = vmatprep.subr.mxu0 0.0
    %1219 = vmatpush1.msra.mxu0 0.0
    %1220 = vmatprep.subr.mxu0 0.0
    %1221 = vmatpush1.msra.mxu0 0.0
    %1222 = vmatprep.subr.mxu0 0.0
    %1223 = vmatpush1.msra.mxu0 0.0
    %1224 = vmatprep.subr.mxu0 0.0
    %1225 = vmatpush1.msra.mxu0 0.0
    %1226 = vmatprep.subr.mxu0 0.0
    %1227 = vmatpush1.msra.mxu0 0.0
    %1228 = vmatprep.mubr.f32.mxu0 0.0
    %v1229 = vand.u32 %v1016, 4294901760
    %v1230 = vsub.f32 %v1016, %v1229
    %1231 = vmatmul.mubr.f32.gmra.mrb[0].mxu0 %v1230
    %v1232 = vpop.f32.mrb[0].mxu0
    %v1233 = vadd.f32 %v1161, %v1232
    %v1234 = vpop.f32.mrb[0].mxu0
    %1235 = vdwg.mxu0
    %1236 = vmatprep.subr.mxu0 0.0
    %1237 = vmatpush1.msra.mxu0 1.0
    %1238 = vmatprep.subr.mxu0 0.0
    %1239 = vmatpush1.msra.mxu0 1.0
    %1240 = vmatprep.subr.mxu0 0.0
    %1241 = vmatpush1.msra.mxu0 1.0
    %1242 = vmatprep.subr.mxu0 0.0
    %1243 = vmatpush1.msra.mxu0 1.0
    %1244 = vmatprep.subr.mxu0 0.0
    %1245 = vmatpush1.msra.mxu0 0.0
    %1246 = vmatprep.subr.mxu0 0.0
    %1247 = vmatpush1.msra.mxu0 0.0
    %1248 = vmatprep.subr.mxu0 0.0
    %1249 = vmatpush1.msra.mxu0 0.0
    %1250 = vmatprep.subr.mxu0 0.0
    %1251 = vmatpush1.msra.mxu0 0.0
    %1252 = vmatprep.subr.mxu0 0.0
    %1253 = vmatpush1.msra.mxu0 0.0
    %1254 = vmatprep.subr.mxu0 0.0
    %1255 = vmatpush1.msra.mxu0 0.0
    %1256 = vmatprep.subr.mxu0 0.0
    %1257 = vmatpush1.msra.mxu0 0.0
    %1258 = vmatprep.subr.mxu0 0.0
    %1259 = vmatpush1.msra.mxu0 0.0
    %1260 = vmatprep.subr.mxu0 0.0
    %1261 = vmatpush1.msra.mxu0 0.0
    %1262 = vmatprep.subr.mxu0 0.0
    %1263 = vmatpush1.msra.mxu0 0.0
    %1264 = vmatprep.subr.mxu0 0.0
    %1265 = vmatpush1.msra.mxu0 0.0
    %1266 = vmatprep.subr.mxu0 0.0
    %1267 = vmatpush1.msra.mxu0 0.0
    %1268 = vmatprep.subr.mxu0 0.0
    %1269 = vmatpush1.msra.mxu0 0.0
    %1270 = vmatprep.subr.mxu0 0.0
    %1271 = vmatpush1.msra.mxu0 0.0
    %1272 = vmatprep.subr.mxu0 0.0
    %1273 = vmatpush1.msra.mxu0 0.0
    %1274 = vmatprep.subr.mxu0 0.0
    %1275 = vmatpush1.msra.mxu0 0.0
    %1276 = vmatprep.subr.mxu0 0.0
    %1277 = vmatpush1.msra.mxu0 0.0
    %1278 = vmatprep.subr.mxu0 0.0
    %1279 = vmatpush1.msra.mxu0 0.0
    %1280 = vmatprep.subr.mxu0 0.0
    %1281 = vmatpush1.msra.mxu0 0.0
    %1282 = vmatprep.subr.mxu0 0.0
    %1283 = vmatpush1.msra.mxu0 0.0
    %1284 = vmatprep.subr.mxu0 0.0
    %1285 = vmatpush1.msra.mxu0 0.0
    %1286 = vmatprep.subr.mxu0 0.0
    %1287 = vmatpush1.msra.mxu0 0.0
    %1288 = vmatprep.subr.mxu0 0.0
    %1289 = vmatpush1.msra.mxu0 0.0
    %1290 = vmatprep.subr.mxu0 0.0
    %1291 = vmatpush1.msra.mxu0 0.0
    %1292 = vmatprep.subr.mxu0 0.0
    %1293 = vmatpush1.msra.mxu0 0.0
    %1294 = vmatprep.subr.mxu0 0.0
    %1295 = vmatpush1.msra.mxu0 0.0
    %1296 = vmatprep.subr.mxu0 0.0
    %1297 = vmatpush1.msra.mxu0 0.0
    %1298 = vmatprep.subr.mxu0 0.0
    %1299 = vmatpush1.msra.mxu0 0.0
    %1300 = vmatprep.mubr.f32.mxu0 0.0
    %v1301 = vand.u32 %v1016, 4294901760
    %v1302 = vsub.f32 %v1016, %v1301
    %v1303 = vand.u32 %v1302, 4294901760
    %1304 = vmatmul.mubr.f32.gmra.mrb[0].mxu0 %v1303
    %v1305 = vpop.f32.mrb[0].mxu0
    %v1306 = vadd.f32 %v1233, %v1305
    %v1307 = vpop.f32.mrb[0].mxu0
    %1308 = vdwg.mxu0
    %1309 = vmatprep.subr.mxu0 0.0
    %1310 = vmatpush1.msra.mxu0 0.0
    %1311 = vmatprep.subr.mxu0 0.0
    %1312 = vmatpush1.msra.mxu0 0.0
    %1313 = vmatprep.subr.mxu0 0.0
    %1314 = vmatpush1.msra.mxu0 0.0
    %1315 = vmatprep.subr.mxu0 0.0
    %1316 = vmatpush1.msra.mxu0 0.0
    %1317 = vmatprep.subr.mxu0 0.0
    %1318 = vmatpush1.msra.mxu0 0.0
    %1319 = vmatprep.subr.mxu0 0.0
    %1320 = vmatpush1.msra.mxu0 0.0
    %1321 = vmatprep.subr.mxu0 0.0
    %1322 = vmatpush1.msra.mxu0 0.0
    %1323 = vmatprep.subr.mxu0 0.0
    %1324 = vmatpush1.msra.mxu0 0.0
    %1325 = vmatprep.subr.mxu0 0.0
    %1326 = vmatpush1.msra.mxu0 0.0
    %1327 = vmatprep.subr.mxu0 0.0
    %1328 = vmatpush1.msra.mxu0 0.0
    %1329 = vmatprep.subr.mxu0 0.0
    %1330 = vmatpush1.msra.mxu0 0.0
    %1331 = vmatprep.subr.mxu0 0.0
    %1332 = vmatpush1.msra.mxu0 0.0
    %1333 = vmatprep.subr.mxu0 0.0
    %1334 = vmatpush1.msra.mxu0 0.0
    %1335 = vmatprep.subr.mxu0 0.0
    %1336 = vmatpush1.msra.mxu0 0.0
    %1337 = vmatprep.subr.mxu0 0.0
    %1338 = vmatpush1.msra.mxu0 0.0
    %1339 = vmatprep.subr.mxu0 0.0
    %1340 = vmatpush1.msra.mxu0 0.0
    %1341 = vmatprep.subr.mxu0 0.0
    %1342 = vmatpush1.msra.mxu0 0.0
    %1343 = vmatprep.subr.mxu0 0.0
    %1344 = vmatpush1.msra.mxu0 0.0
    %1345 = vmatprep.subr.mxu0 0.0
    %1346 = vmatpush1.msra.mxu0 0.0
    %1347 = vmatprep.subr.mxu0 0.0
    %1348 = vmatpush1.msra.mxu0 0.0
    %1349 = vmatprep.subr.mxu0 0.0
    %1350 = vmatpush1.msra.mxu0 0.0
    %1351 = vmatprep.subr.mxu0 0.0
    %1352 = vmatpush1.msra.mxu0 0.0
    %1353 = vmatprep.subr.mxu0 0.0
    %1354 = vmatpush1.msra.mxu0 0.0
    %1355 = vmatprep.subr.mxu0 0.0
    %1356 = vmatpush1.msra.mxu0 0.0
    %1357 = vmatprep.subr.mxu0 0.0
    %1358 = vmatpush1.msra.mxu0 0.0
    %1359 = vmatprep.subr.mxu0 0.0
    %1360 = vmatpush1.msra.mxu0 0.0
    %1361 = vmatprep.subr.mxu0 0.0
    %1362 = vmatpush1.msra.mxu0 0.0
    %1363 = vmatprep.subr.mxu0 0.0
    %1364 = vmatpush1.msra.mxu0 0.0
    %1365 = vmatprep.subr.mxu0 0.0
    %1366 = vmatpush1.msra.mxu0 0.0
    %1367 = vmatprep.subr.mxu0 0.0
    %1368 = vmatpush1.msra.mxu0 0.0
    %1369 = vmatprep.subr.mxu0 0.0
    %1370 = vmatpush1.msra.mxu0 0.0
    %1371 = vmatprep.subr.mxu0 0.0
    %1372 = vmatpush1.msra.mxu0 0.0
    %1373 = vmatprep.mubr.f32.mxu0 0.0
    %v1374 = vand.u32 %v1016, 4294901760
    %1375 = vmatmul.mubr.f32.gmra.mrb[0].mxu0 %v1374
    %v1376 = vpop.f32.mrb[0].mxu0
    %v1377 = vadd.f32 %v1306, %v1376
    %v1378 = vpop.f32.mrb[0].mxu0
    %1379 = vdwg.mxu0
    %1380 = vmatprep.subr.mxu0 0.0
    %1381 = vmatpush1.msra.mxu0 1.0
    %1382 = vmatprep.subr.mxu0 0.0
    %1383 = vmatpush1.msra.mxu0 1.0
    %1384 = vmatprep.subr.mxu0 0.0
    %1385 = vmatpush1.msra.mxu0 1.0
    %1386 = vmatprep.subr.mxu0 0.0
    %1387 = vmatpush1.msra.mxu0 1.0
    %1388 = vmatprep.subr.mxu0 0.0
    %1389 = vmatpush1.msra.mxu0 0.0
    %1390 = vmatprep.subr.mxu0 0.0
    %1391 = vmatpush1.msra.mxu0 0.0
    %1392 = vmatprep.subr.mxu0 0.0
    %1393 = vmatpush1.msra.mxu0 0.0
    %1394 = vmatprep.subr.mxu0 0.0
    %1395 = vmatpush1.msra.mxu0 0.0
    %1396 = vmatprep.subr.mxu0 0.0
    %1397 = vmatpush1.msra.mxu0 0.0
    %1398 = vmatprep.subr.mxu0 0.0
    %1399 = vmatpush1.msra.mxu0 0.0
    %1400 = vmatprep.subr.mxu0 0.0
    %1401 = vmatpush1.msra.mxu0 0.0
    %1402 = vmatprep.subr.mxu0 0.0
    %1403 = vmatpush1.msra.mxu0 0.0
    %1404 = vmatprep.subr.mxu0 0.0
    %1405 = vmatpush1.msra.mxu0 0.0
    %1406 = vmatprep.subr.mxu0 0.0
    %1407 = vmatpush1.msra.mxu0 0.0
    %1408 = vmatprep.subr.mxu0 0.0
    %1409 = vmatpush1.msra.mxu0 0.0
    %1410 = vmatprep.subr.mxu0 0.0
    %1411 = vmatpush1.msra.mxu0 0.0
    %1412 = vmatprep.subr.mxu0 0.0
    %1413 = vmatpush1.msra.mxu0 0.0
    %1414 = vmatprep.subr.mxu0 0.0
    %1415 = vmatpush1.msra.mxu0 0.0
    %1416 = vmatprep.subr.mxu0 0.0
    %1417 = vmatpush1.msra.mxu0 0.0
    %1418 = vmatprep.subr.mxu0 0.0
    %1419 = vmatpush1.msra.mxu0 0.0
    %1420 = vmatprep.subr.mxu0 0.0
    %1421 = vmatpush1.msra.mxu0 0.0
    %1422 = vmatprep.subr.mxu0 0.0
    %1423 = vmatpush1.msra.mxu0 0.0
    %1424 = vmatprep.subr.mxu0 0.0
    %1425 = vmatpush1.msra.mxu0 0.0
    %1426 = vmatprep.subr.mxu0 0.0
    %1427 = vmatpush1.msra.mxu0 0.0
    %1428 = vmatprep.subr.mxu0 0.0
    %1429 = vmatpush1.msra.mxu0 0.0
    %1430 = vmatprep.subr.mxu0 0.0
    %1431 = vmatpush1.msra.mxu0 0.0
    %1432 = vmatprep.subr.mxu0 0.0
    %1433 = vmatpush1.msra.mxu0 0.0
    %1434 = vmatprep.subr.mxu0 0.0
    %1435 = vmatpush1.msra.mxu0 0.0
    %1436 = vmatprep.subr.mxu0 0.0
    %1437 = vmatpush1.msra.mxu0 0.0
    %1438 = vmatprep.subr.mxu0 0.0
    %1439 = vmatpush1.msra.mxu0 0.0
    %1440 = vmatprep.subr.mxu0 0.0
    %1441 = vmatpush1.msra.mxu0 0.0
    %1442 = vmatprep.subr.mxu0 0.0
    %1443 = vmatpush1.msra.mxu0 0.0
    %1444 = vmatprep.mubr.f32.mxu0 0.0
    %v1445 = vand.u32 %v1016, 4294901760
    %1446 = vmatmul.mubr.f32.gmra.mrb[0].mxu0 %v1445
    %v1447 = vpop.f32.mrb[0].mxu0
    %v1448 = vadd.f32 %v1377, %v1447
    %v1449 = vpop.f32.mrb[0].mxu0
    %1450 = vdwg.mxu0
    %v1451 = vrcp.pop %v1448
    %v1452 = vmul.f32 %v1014, %v1451
    %v1453 = vld [vmem:[#allocation2] sm:$0xff]
    %v1454 = vld [vmem:[%s3] sm:$0xff]
    %v1455 = vld [vmem:[%s3 + $0x8] sm:$0xff]
    %v1456 = vld [vmem:[%s3 + $0x10] sm:$0xff]
    %v1457 = vld [vmem:[%s5] sm:$0x7]
    %v1458 = vlaneseq
    %v1459 = vshrl.u32 %v1458, 7
    %v1460 = vsub.s32 0, %v1459
    %v1461 = vrot.slane %v1457, %v1460
    %vm1462 = vcmask 195584
    %v1464 = vsel %vm1462, %v1453, 0
    %1466 = vmatprep.subr.mxu0 0.0
    %1467 = vmatpush1.msra.mxu0 %v1454
    %1468 = vmatprep.subr.mxu0 0.0
    %1469 = vmatpush1.msra.mxu0 %v1455
    %1470 = vmatprep.subr.mxu0 0.0
    %1471 = vmatpush1.msra.mxu0 %v1456
    %1472 = vmatprep.subr.mxu0 0.0
    %1473 = vmatpush1.msra.mxu0 0.0
    %1474 = vmatprep.subr.mxu0 0.0
    %1475 = vmatpush1.msra.mxu0 0.0
    %1476 = vmatprep.subr.mxu0 0.0
    %1477 = vmatpush1.msra.mxu0 0.0
    %1478 = vmatprep.subr.mxu0 0.0
    %1479 = vmatpush1.msra.mxu0 0.0
    %1480 = vmatprep.subr.mxu0 0.0
    %1481 = vmatpush1.msra.mxu0 0.0
    %1482 = vmatprep.subr.mxu0 0.0
    %1483 = vmatpush1.msra.mxu0 0.0
    %1484 = vmatprep.subr.mxu0 0.0
    %1485 = vmatpush1.msra.mxu0 0.0
    %1486 = vmatprep.subr.mxu0 0.0
    %1487 = vmatpush1.msra.mxu0 0.0
    %1488 = vmatprep.subr.mxu0 0.0
    %1489 = vmatpush1.msra.mxu0 0.0
    %1490 = vmatprep.subr.mxu0 0.0
    %1491 = vmatpush1.msra.mxu0 0.0
    %1492 = vmatprep.subr.mxu0 0.0
    %1493 = vmatpush1.msra.mxu0 0.0
    %1494 = vmatprep.subr.mxu0 0.0
    %1495 = vmatpush1.msra.mxu0 0.0
    %1496 = vmatprep.subr.mxu0 0.0
    %1497 = vmatpush1.msra.mxu0 0.0
    %1498 = vmatprep.subr.mxu0 0.0
    %1499 = vmatpush1.msra.mxu0 0.0
    %1500 = vmatprep.subr.mxu0 0.0
    %1501 = vmatpush1.msra.mxu0 0.0
    %1502 = vmatprep.subr.mxu0 0.0
    %1503 = vmatpush1.msra.mxu0 0.0
    %1504 = vmatprep.subr.mxu0 0.0
    %1505 = vmatpush1.msra.mxu0 0.0
    %1506 = vmatprep.subr.mxu0 0.0
    %1507 = vmatpush1.msra.mxu0 0.0
    %1508 = vmatprep.subr.mxu0 0.0
    %1509 = vmatpush1.msra.mxu0 0.0
    %1510 = vmatprep.subr.mxu0 0.0
    %1511 = vmatpush1.msra.mxu0 0.0
    %1512 = vmatprep.subr.mxu0 0.0
    %1513 = vmatpush1.msra.mxu0 0.0
    %1514 = vmatprep.subr.mxu0 0.0
    %1515 = vmatpush1.msra.mxu0 0.0
    %1516 = vmatprep.subr.mxu0 0.0
    %1517 = vmatpush1.msra.mxu0 0.0
    %1518 = vmatprep.subr.mxu0 0.0
    %1519 = vmatpush1.msra.mxu0 0.0
    %1520 = vmatprep.subr.mxu0 0.0
    %1521 = vmatpush1.msra.mxu0 0.0
    %1522 = vmatprep.subr.mxu0 0.0
    %1523 = vmatpush1.msra.mxu0 0.0
    %1524 = vmatprep.subr.mxu0 0.0
    %1525 = vmatpush1.msra.mxu0 0.0
    %1526 = vmatprep.subr.mxu0 0.0
    %1527 = vmatpush1.msra.mxu0 0.0
    %1528 = vmatprep.subr.mxu0 0.0
    %1529 = vmatpush1.msra.mxu0 0.0
    %1530 = vmatprep.mubr.f32.mxu0 0.0
    %1531 = vmatmul.mubr.f32.gmra.mrb[0].mxu0 %v1464
    %v1532 = vpop.f32.mrb[0].mxu0
    %v1533 = vadd.f32 %v1461, %v1532
    %v1534 = vpop.f32.mrb[0].mxu0
    %1535 = vdwg.mxu0
    %vm1536 = vcmask 130048
    %v1538 = vsel %vm1536, %v1533, 0
    %1540 = vmatprep.subr.mxu0 0.0
    %1541 = vmatpush1.msra.mxu0 1.0
    %1542 = vmatprep.subr.mxu0 0.0
    %1543 = vmatpush1.msra.mxu0 1.0
    %1544 = vmatprep.subr.mxu0 0.0
    %1545 = vmatpush1.msra.mxu0 0.0
    %1546 = vmatprep.subr.mxu0 0.0
    %1547 = vmatpush1.msra.mxu0 0.0
    %1548 = vmatprep.subr.mxu0 0.0
    %1549 = vmatpush1.msra.mxu0 0.0
    %1550 = vmatprep.subr.mxu0 0.0
    %1551 = vmatpush1.msra.mxu0 0.0
    %1552 = vmatprep.subr.mxu0 0.0
    %1553 = vmatpush1.msra.mxu0 0.0
    %1554 = vmatprep.subr.mxu0 0.0
    %1555 = vmatpush1.msra.mxu0 0.0
    %1556 = vmatprep.subr.mxu0 0.0
    %1557 = vmatpush1.msra.mxu0 0.0
    %1558 = vmatprep.subr.mxu0 0.0
    %1559 = vmatpush1.msra.mxu0 0.0
    %1560 = vmatprep.subr.mxu0 0.0
    %1561 = vmatpush1.msra.mxu0 0.0
    %1562 = vmatprep.subr.mxu0 0.0
    %1563 = vmatpush1.msra.mxu0 0.0
    %1564 = vmatprep.subr.mxu0 0.0
    %1565 = vmatpush1.msra.mxu0 0.0
    %1566 = vmatprep.subr.mxu0 0.0
    %1567 = vmatpush1.msra.mxu0 0.0
    %1568 = vmatprep.subr.mxu0 0.0
    %1569 = vmatpush1.msra.mxu0 0.0
    %1570 = vmatprep.subr.mxu0 0.0
    %1571 = vmatpush1.msra.mxu0 0.0
    %1572 = vmatprep.subr.mxu0 0.0
    %1573 = vmatpush1.msra.mxu0 0.0
    %1574 = vmatprep.subr.mxu0 0.0
    %1575 = vmatpush1.msra.mxu0 0.0
    %1576 = vmatprep.subr.mxu0 0.0
    %1577 = vmatpush1.msra.mxu0 0.0
    %1578 = vmatprep.subr.mxu0 0.0
    %1579 = vmatpush1.msra.mxu0 0.0
    %1580 = vmatprep.subr.mxu0 0.0
    %1581 = vmatpush1.msra.mxu0 0.0
    %1582 = vmatprep.subr.mxu0 0.0
    %1583 = vmatpush1.msra.mxu0 0.0
    %1584 = vmatprep.subr.mxu0 0.0
    %1585 = vmatpush1.msra.mxu0 0.0
    %1586 = vmatprep.subr.mxu0 0.0
    %1587 = vmatpush1.msra.mxu0 0.0
    %1588 = vmatprep.subr.mxu0 0.0
    %1589 = vmatpush1.msra.mxu0 0.0
    %1590 = vmatprep.subr.mxu0 0.0
    %1591 = vmatpush1.msra.mxu0 0.0
    %1592 = vmatprep.subr.mxu0 0.0
    %1593 = vmatpush1.msra.mxu0 0.0
    %1594 = vmatprep.subr.mxu0 0.0
    %1595 = vmatpush1.msra.mxu0 0.0
    %1596 = vmatprep.subr.mxu0 0.0
    %1597 = vmatpush1.msra.mxu0 0.0
    %1598 = vmatprep.subr.mxu0 0.0
    %1599 = vmatpush1.msra.mxu0 0.0
    %1600 = vmatprep.subr.mxu0 0.0
    %1601 = vmatpush1.msra.mxu0 0.0
    %1602 = vmatprep.subr.mxu0 0.0
    %1603 = vmatpush1.msra.mxu0 0.0
    %1604 = vmatprep.mubr.f32.mxu0 0.0
    %v1605 = vand.u32 %v1538, 4294901760
    %v1606 = vsub.f32 %v1538, %v1605
    %v1607 = vand.u32 %v1606, 4294901760
    %v1608 = vsub.f32 %v1606, %v1607
    %v1609 = vand.u32 %v1608, 4294901760
    %1610 = vmatmul.mubr.f32.gmra.mrb[0].mxu0 %v1609
    %v1611 = vpop.f32.mrb[0].mxu0
    %v1612 = vadd.f32 0.0, %v1611
    %v1613 = vpop.f32.mrb[0].mxu0
    %1614 = vdwg.mxu0
    %1615 = vmatprep.subr.mxu0 0.0
    %1616 = vmatpush1.msra.mxu0 0.0
    %1617 = vmatprep.subr.mxu0 0.0
    %1618 = vmatpush1.msra.mxu0 0.0
    %1619 = vmatprep.subr.mxu0 0.0
    %1620 = vmatpush1.msra.mxu0 0.0
    %1621 = vmatprep.subr.mxu0 0.0
    %1622 = vmatpush1.msra.mxu0 0.0
    %1623 = vmatprep.subr.mxu0 0.0
    %1624 = vmatpush1.msra.mxu0 0.0
    %1625 = vmatprep.subr.mxu0 0.0
    %1626 = vmatpush1.msra.mxu0 0.0
    %1627 = vmatprep.subr.mxu0 0.0
    %1628 = vmatpush1.msra.mxu0 0.0
    %1629 = vmatprep.subr.mxu0 0.0
    %1630 = vmatpush1.msra.mxu0 0.0
    %1631 = vmatprep.subr.mxu0 0.0
    %1632 = vmatpush1.msra.mxu0 0.0
    %1633 = vmatprep.subr.mxu0 0.0
    %1634 = vmatpush1.msra.mxu0 0.0
    %1635 = vmatprep.subr.mxu0 0.0
    %1636 = vmatpush1.msra.mxu0 0.0
    %1637 = vmatprep.subr.mxu0 0.0
    %1638 = vmatpush1.msra.mxu0 0.0
    %1639 = vmatprep.subr.mxu0 0.0
    %1640 = vmatpush1.msra.mxu0 0.0
    %1641 = vmatprep.subr.mxu0 0.0
    %1642 = vmatpush1.msra.mxu0 0.0
    %1643 = vmatprep.subr.mxu0 0.0
    %1644 = vmatpush1.msra.mxu0 0.0
    %1645 = vmatprep.subr.mxu0 0.0
    %1646 = vmatpush1.msra.mxu0 0.0
    %1647 = vmatprep.subr.mxu0 0.0
    %1648 = vmatpush1.msra.mxu0 0.0
    %1649 = vmatprep.subr.mxu0 0.0
    %1650 = vmatpush1.msra.mxu0 0.0
    %1651 = vmatprep.subr.mxu0 0.0
    %1652 = vmatpush1.msra.mxu0 0.0
    %1653 = vmatprep.subr.mxu0 0.0
    %1654 = vmatpush1.msra.mxu0 0.0
    %1655 = vmatprep.subr.mxu0 0.0
    %1656 = vmatpush1.msra.mxu0 0.0
    %1657 = vmatprep.subr.mxu0 0.0
    %1658 = vmatpush1.msra.mxu0 0.0
    %1659 = vmatprep.subr.mxu0 0.0
    %1660 = vmatpush1.msra.mxu0 0.0
    %1661 = vmatprep.subr.mxu0 0.0
    %1662 = vmatpush1.msra.mxu0 0.0
    %1663 = vmatprep.subr.mxu0 0.0
    %1664 = vmatpush1.msra.mxu0 0.0
    %1665 = vmatprep.subr.mxu0 0.0
    %1666 = vmatpush1.msra.mxu0 0.0
    %1667 = vmatprep.subr.mxu0 0.0
    %1668 = vmatpush1.msra.mxu0 0.0
    %1669 = vmatprep.subr.mxu0 0.0
    %1670 = vmatpush1.msra.mxu0 0.0
    %1671 = vmatprep.subr.mxu0 0.0
    %1672 = vmatpush1.msra.mxu0 0.0
    %1673 = vmatprep.subr.mxu0 0.0
    %1674 = vmatpush1.msra.mxu0 0.0
    %1675 = vmatprep.subr.mxu0 0.0
    %1676 = vmatpush1.msra.mxu0 0.0
    %1677 = vmatprep.subr.mxu0 0.0
    %1678 = vmatpush1.msra.mxu0 0.0
    %1679 = vmatprep.mubr.f32.mxu0 0.0
    %v1680 = vand.u32 %v1538, 4294901760
    %1681 = vmatmul.mubr.f32.gmra.mrb[0].mxu0 %v1680
    %v1682 = vpop.f32.mrb[0].mxu0
    %v1683 = vadd.f32 %v1612, %v1682
    %v1684 = vpop.f32.mrb[0].mxu0
    %1685 = vdwg.mxu0
    %1686 = vmatprep.subr.mxu0 0.0
    %1687 = vmatpush1.msra.mxu0 0.0
    %1688 = vmatprep.subr.mxu0 0.0
    %1689 = vmatpush1.msra.mxu0 0.0
    %1690 = vmatprep.subr.mxu0 0.0
    %1691 = vmatpush1.msra.mxu0 0.0
    %1692 = vmatprep.subr.mxu0 0.0
    %1693 = vmatpush1.msra.mxu0 0.0
    %1694 = vmatprep.subr.mxu0 0.0
    %1695 = vmatpush1.msra.mxu0 0.0
    %1696 = vmatprep.subr.mxu0 0.0
    %1697 = vmatpush1.msra.mxu0 0.0
    %1698 = vmatprep.subr.mxu0 0.0
    %1699 = vmatpush1.msra.mxu0 0.0
    %1700 = vmatprep.subr.mxu0 0.0
    %1701 = vmatpush1.msra.mxu0 0.0
    %1702 = vmatprep.subr.mxu0 0.0
    %1703 = vmatpush1.msra.mxu0 0.0
    %1704 = vmatprep.subr.mxu0 0.0
    %1705 = vmatpush1.msra.mxu0 0.0
    %1706 = vmatprep.subr.mxu0 0.0
    %1707 = vmatpush1.msra.mxu0 0.0
    %1708 = vmatprep.subr.mxu0 0.0
    %1709 = vmatpush1.msra.mxu0 0.0
    %1710 = vmatprep.subr.mxu0 0.0
    %1711 = vmatpush1.msra.mxu0 0.0
    %1712 = vmatprep.subr.mxu0 0.0
    %1713 = vmatpush1.msra.mxu0 0.0
    %1714 = vmatprep.subr.mxu0 0.0
    %1715 = vmatpush1.msra.mxu0 0.0
    %1716 = vmatprep.subr.mxu0 0.0
    %1717 = vmatpush1.msra.mxu0 0.0
    %1718 = vmatprep.subr.mxu0 0.0
    %1719 = vmatpush1.msra.mxu0 0.0
    %1720 = vmatprep.subr.mxu0 0.0
    %1721 = vmatpush1.msra.mxu0 0.0
    %1722 = vmatprep.subr.mxu0 0.0
    %1723 = vmatpush1.msra.mxu0 0.0
    %1724 = vmatprep.subr.mxu0 0.0
    %1725 = vmatpush1.msra.mxu0 0.0
    %1726 = vmatprep.subr.mxu0 0.0
    %1727 = vmatpush1.msra.mxu0 0.0
    %1728 = vmatprep.subr.mxu0 0.0
    %1729 = vmatpush1.msra.mxu0 0.0
    %1730 = vmatprep.subr.mxu0 0.0
    %1731 = vmatpush1.msra.mxu0 0.0
    %1732 = vmatprep.subr.mxu0 0.0
    %1733 = vmatpush1.msra.mxu0 0.0
    %1734 = vmatprep.subr.mxu0 0.0
    %1735 = vmatpush1.msra.mxu0 0.0
    %1736 = vmatprep.subr.mxu0 0.0
    %1737 = vmatpush1.msra.mxu0 0.0
    %1738 = vmatprep.subr.mxu0 0.0
    %1739 = vmatpush1.msra.mxu0 0.0
    %1740 = vmatprep.subr.mxu0 0.0
    %1741 = vmatpush1.msra.mxu0 0.0
    %1742 = vmatprep.subr.mxu0 0.0
    %1743 = vmatpush1.msra.mxu0 0.0
    %1744 = vmatprep.subr.mxu0 0.0
    %1745 = vmatpush1.msra.mxu0 0.0
    %1746 = vmatprep.subr.mxu0 0.0
    %1747 = vmatpush1.msra.mxu0 0.0
    %1748 = vmatprep.subr.mxu0 0.0
    %1749 = vmatpush1.msra.mxu0 0.0
    %1750 = vmatprep.mubr.f32.mxu0 0.0
    %v1751 = vand.u32 %v1538, 4294901760
    %v1752 = vsub.f32 %v1538, %v1751
    %1753 = vmatmul.mubr.f32.gmra.mrb[0].mxu0 %v1752
    %v1754 = vpop.f32.mrb[0].mxu0
    %v1755 = vadd.f32 %v1683, %v1754
    %v1756 = vpop.f32.mrb[0].mxu0
    %1757 = vdwg.mxu0
    %1758 = vmatprep.subr.mxu0 0.0
    %1759 = vmatpush1.msra.mxu0 1.0
    %1760 = vmatprep.subr.mxu0 0.0
    %1761 = vmatpush1.msra.mxu0 1.0
    %1762 = vmatprep.subr.mxu0 0.0
    %1763 = vmatpush1.msra.mxu0 0.0
    %1764 = vmatprep.subr.mxu0 0.0
    %1765 = vmatpush1.msra.mxu0 0.0
    %1766 = vmatprep.subr.mxu0 0.0
    %1767 = vmatpush1.msra.mxu0 0.0
    %1768 = vmatprep.subr.mxu0 0.0
    %1769 = vmatpush1.msra.mxu0 0.0
    %1770 = vmatprep.subr.mxu0 0.0
    %1771 = vmatpush1.msra.mxu0 0.0
    %1772 = vmatprep.subr.mxu0 0.0
    %1773 = vmatpush1.msra.mxu0 0.0
    %1774 = vmatprep.subr.mxu0 0.0
    %1775 = vmatpush1.msra.mxu0 0.0
    %1776 = vmatprep.subr.mxu0 0.0
    %1777 = vmatpush1.msra.mxu0 0.0
    %1778 = vmatprep.subr.mxu0 0.0
    %1779 = vmatpush1.msra.mxu0 0.0
    %1780 = vmatprep.subr.mxu0 0.0
    %1781 = vmatpush1.msra.mxu0 0.0
    %1782 = vmatprep.subr.mxu0 0.0
    %1783 = vmatpush1.msra.mxu0 0.0
    %1784 = vmatprep.subr.mxu0 0.0
    %1785 = vmatpush1.msra.mxu0 0.0
    %1786 = vmatprep.subr.mxu0 0.0
    %1787 = vmatpush1.msra.mxu0 0.0
    %1788 = vmatprep.subr.mxu0 0.0
    %1789 = vmatpush1.msra.mxu0 0.0
    %1790 = vmatprep.subr.mxu0 0.0
    %1791 = vmatpush1.msra.mxu0 0.0
    %1792 = vmatprep.subr.mxu0 0.0
    %1793 = vmatpush1.msra.mxu0 0.0
    %1794 = vmatprep.subr.mxu0 0.0
    %1795 = vmatpush1.msra.mxu0 0.0
    %1796 = vmatprep.subr.mxu0 0.0
    %1797 = vmatpush1.msra.mxu0 0.0
    %1798 = vmatprep.subr.mxu0 0.0
    %1799 = vmatpush1.msra.mxu0 0.0
    %1800 = vmatprep.subr.mxu0 0.0
    %1801 = vmatpush1.msra.mxu0 0.0
    %1802 = vmatprep.subr.mxu0 0.0
    %1803 = vmatpush1.msra.mxu0 0.0
    %1804 = vmatprep.subr.mxu0 0.0
    %1805 = vmatpush1.msra.mxu0 0.0
    %1806 = vmatprep.subr.mxu0 0.0
    %1807 = vmatpush1.msra.mxu0 0.0
    %1808 = vmatprep.subr.mxu0 0.0
    %1809 = vmatpush1.msra.mxu0 0.0
    %1810 = vmatprep.subr.mxu0 0.0
    %1811 = vmatpush1.msra.mxu0 0.0
    %1812 = vmatprep.subr.mxu0 0.0
    %1813 = vmatpush1.msra.mxu0 0.0
    %1814 = vmatprep.subr.mxu0 0.0
    %1815 = vmatpush1.msra.mxu0 0.0
    %1816 = vmatprep.subr.mxu0 0.0
    %1817 = vmatpush1.msra.mxu0 0.0
    %1818 = vmatprep.subr.mxu0 0.0
    %1819 = vmatpush1.msra.mxu0 0.0
    %1820 = vmatprep.subr.mxu0 0.0
    %1821 = vmatpush1.msra.mxu0 0.0
    %1822 = vmatprep.mubr.f32.mxu0 0.0
    %v1823 = vand.u32 %v1538, 4294901760
    %v1824 = vsub.f32 %v1538, %v1823
    %v1825 = vand.u32 %v1824, 4294901760
    %1826 = vmatmul.mubr.f32.gmra.mrb[0].mxu0 %v1825
    %v1827 = vpop.f32.mrb[0].mxu0
    %v1828 = vadd.f32 %v1755, %v1827
    %v1829 = vpop.f32.mrb[0].mxu0
    %1830 = vdwg.mxu0
    %1831 = vmatprep.subr.mxu0 0.0
    %1832 = vmatpush1.msra.mxu0 0.0
    %1833 = vmatprep.subr.mxu0 0.0
    %1834 = vmatpush1.msra.mxu0 0.0
    %1835 = vmatprep.subr.mxu0 0.0
    %1836 = vmatpush1.msra.mxu0 0.0
    %1837 = vmatprep.subr.mxu0 0.0
    %1838 = vmatpush1.msra.mxu0 0.0
    %1839 = vmatprep.subr.mxu0 0.0
    %1840 = vmatpush1.msra.mxu0 0.0
    %1841 = vmatprep.subr.mxu0 0.0
    %1842 = vmatpush1.msra.mxu0 0.0
    %1843 = vmatprep.subr.mxu0 0.0
    %1844 = vmatpush1.msra.mxu0 0.0
    %1845 = vmatprep.subr.mxu0 0.0
    %1846 = vmatpush1.msra.mxu0 0.0
    %1847 = vmatprep.subr.mxu0 0.0
    %1848 = vmatpush1.msra.mxu0 0.0
    %1849 = vmatprep.subr.mxu0 0.0
    %1850 = vmatpush1.msra.mxu0 0.0
    %1851 = vmatprep.subr.mxu0 0.0
    %1852 = vmatpush1.msra.mxu0 0.0
    %1853 = vmatprep.subr.mxu0 0.0
    %1854 = vmatpush1.msra.mxu0 0.0
    %1855 = vmatprep.subr.mxu0 0.0
    %1856 = vmatpush1.msra.mxu0 0.0
    %1857 = vmatprep.subr.mxu0 0.0
    %1858 = vmatpush1.msra.mxu0 0.0
    %1859 = vmatprep.subr.mxu0 0.0
    %1860 = vmatpush1.msra.mxu0 0.0
    %1861 = vmatprep.subr.mxu0 0.0
    %1862 = vmatpush1.msra.mxu0 0.0
    %1863 = vmatprep.subr.mxu0 0.0
    %1864 = vmatpush1.msra.mxu0 0.0
    %1865 = vmatprep.subr.mxu0 0.0
    %1866 = vmatpush1.msra.mxu0 0.0
    %1867 = vmatprep.subr.mxu0 0.0
    %1868 = vmatpush1.msra.mxu0 0.0
    %1869 = vmatprep.subr.mxu0 0.0
    %1870 = vmatpush1.msra.mxu0 0.0
    %1871 = vmatprep.subr.mxu0 0.0
    %1872 = vmatpush1.msra.mxu0 0.0
    %1873 = vmatprep.subr.mxu0 0.0
    %1874 = vmatpush1.msra.mxu0 0.0
    %1875 = vmatprep.subr.mxu0 0.0
    %1876 = vmatpush1.msra.mxu0 0.0
    %1877 = vmatprep.subr.mxu0 0.0
    %1878 = vmatpush1.msra.mxu0 0.0
    %1879 = vmatprep.subr.mxu0 0.0
    %1880 = vmatpush1.msra.mxu0 0.0
    %1881 = vmatprep.subr.mxu0 0.0
    %1882 = vmatpush1.msra.mxu0 0.0
    %1883 = vmatprep.subr.mxu0 0.0
    %1884 = vmatpush1.msra.mxu0 0.0
    %1885 = vmatprep.subr.mxu0 0.0
    %1886 = vmatpush1.msra.mxu0 0.0
    %1887 = vmatprep.subr.mxu0 0.0
    %1888 = vmatpush1.msra.mxu0 0.0
    %1889 = vmatprep.subr.mxu0 0.0
    %1890 = vmatpush1.msra.mxu0 0.0
    %1891 = vmatprep.subr.mxu0 0.0
    %1892 = vmatpush1.msra.mxu0 0.0
    %1893 = vmatprep.subr.mxu0 0.0
    %1894 = vmatpush1.msra.mxu0 0.0
    %1895 = vmatprep.mubr.f32.mxu0 0.0
    %v1896 = vand.u32 %v1538, 4294901760
    %1897 = vmatmul.mubr.f32.gmra.mrb[0].mxu0 %v1896
    %v1898 = vpop.f32.mrb[0].mxu0
    %v1899 = vadd.f32 %v1828, %v1898
    %v1900 = vpop.f32.mrb[0].mxu0
    %1901 = vdwg.mxu0
    %1902 = vmatprep.subr.mxu0 0.0
    %1903 = vmatpush1.msra.mxu0 1.0
    %1904 = vmatprep.subr.mxu0 0.0
    %1905 = vmatpush1.msra.mxu0 1.0
    %1906 = vmatprep.subr.mxu0 0.0
    %1907 = vmatpush1.msra.mxu0 0.0
    %1908 = vmatprep.subr.mxu0 0.0
    %1909 = vmatpush1.msra.mxu0 0.0
    %1910 = vmatprep.subr.mxu0 0.0
    %1911 = vmatpush1.msra.mxu0 0.0
    %1912 = vmatprep.subr.mxu0 0.0
    %1913 = vmatpush1.msra.mxu0 0.0
    %1914 = vmatprep.subr.mxu0 0.0
    %1915 = vmatpush1.msra.mxu0 0.0
    %1916 = vmatprep.subr.mxu0 0.0
    %1917 = vmatpush1.msra.mxu0 0.0
    %1918 = vmatprep.subr.mxu0 0.0
    %1919 = vmatpush1.msra.mxu0 0.0
    %1920 = vmatprep.subr.mxu0 0.0
    %1921 = vmatpush1.msra.mxu0 0.0
    %1922 = vmatprep.subr.mxu0 0.0
    %1923 = vmatpush1.msra.mxu0 0.0
    %1924 = vmatprep.subr.mxu0 0.0
    %1925 = vmatpush1.msra.mxu0 0.0
    %1926 = vmatprep.subr.mxu0 0.0
    %1927 = vmatpush1.msra.mxu0 0.0
    %1928 = vmatprep.subr.mxu0 0.0
    %1929 = vmatpush1.msra.mxu0 0.0
    %1930 = vmatprep.subr.mxu0 0.0
    %1931 = vmatpush1.msra.mxu0 0.0
    %1932 = vmatprep.subr.mxu0 0.0
    %1933 = vmatpush1.msra.mxu0 0.0
    %1934 = vmatprep.subr.mxu0 0.0
    %1935 = vmatpush1.msra.mxu0 0.0
    %1936 = vmatprep.subr.mxu0 0.0
    %1937 = vmatpush1.msra.mxu0 0.0
    %1938 = vmatprep.subr.mxu0 0.0
    %1939 = vmatpush1.msra.mxu0 0.0
    %1940 = vmatprep.subr.mxu0 0.0
    %1941 = vmatpush1.msra.mxu0 0.0
    %1942 = vmatprep.subr.mxu0 0.0
    %1943 = vmatpush1.msra.mxu0 0.0
    %1944 = vmatprep.subr.mxu0 0.0
    %1945 = vmatpush1.msra.mxu0 0.0
    %1946 = vmatprep.subr.mxu0 0.0
    %1947 = vmatpush1.msra.mxu0 0.0
    %1948 = vmatprep.subr.mxu0 0.0
    %1949 = vmatpush1.msra.mxu0 0.0
    %1950 = vmatprep.subr.mxu0 0.0
    %1951 = vmatpush1.msra.mxu0 0.0
    %1952 = vmatprep.subr.mxu0 0.0
    %1953 = vmatpush1.msra.mxu0 0.0
    %1954 = vmatprep.subr.mxu0 0.0
    %1955 = vmatpush1.msra.mxu0 0.0
    %1956 = vmatprep.subr.mxu0 0.0
    %1957 = vmatpush1.msra.mxu0 0.0
    %1958 = vmatprep.subr.mxu0 0.0
    %1959 = vmatpush1.msra.mxu0 0.0
    %1960 = vmatprep.subr.mxu0 0.0
    %1961 = vmatpush1.msra.mxu0 0.0
    %1962 = vmatprep.subr.mxu0 0.0
    %1963 = vmatpush1.msra.mxu0 0.0
    %1964 = vmatprep.subr.mxu0 0.0
    %1965 = vmatpush1.msra.mxu0 0.0
    %1966 = vmatprep.mubr.f32.mxu0 0.0
    %v1967 = vand.u32 %v1538, 4294901760
    %1968 = vmatmul.mubr.f32.gmra.mrb[0].mxu0 %v1967
    %v1969 = vpop.f32.mrb[0].mxu0
    %v1970 = vadd.f32 %v1899, %v1969
    %v1971 = vpop.f32.mrb[0].mxu0
    %1972 = vdwg.mxu0
    %v1973 = vmul.f32 %v1970, 0.0625
    %v1974 = vsub.f32 %v1533, %v1973
    %v1975 = vmul.f32 %v1974, %v1974
    %v1977 = vsel %vm1536, %v1975, 0
    %1979 = vmatprep.subr.mxu0 0.0
    %1980 = vmatpush1.msra.mxu0 1.0
    %1981 = vmatprep.subr.mxu0 0.0
    %1982 = vmatpush1.msra.mxu0 1.0
    %1983 = vmatprep.subr.mxu0 0.0
    %1984 = vmatpush1.msra.mxu0 0.0
    %1985 = vmatprep.subr.mxu0 0.0
    %1986 = vmatpush1.msra.mxu0 0.0
    %1987 = vmatprep.subr.mxu0 0.0
    %1988 = vmatpush1.msra.mxu0 0.0
    %1989 = vmatprep.subr.mxu0 0.0
    %1990 = vmatpush1.msra.mxu0 0.0
    %1991 = vmatprep.subr.mxu0 0.0
    %1992 = vmatpush1.msra.mxu0 0.0
    %1993 = vmatprep.subr.mxu0 0.0
    %1994 = vmatpush1.msra.mxu0 0.0
    %1995 = vmatprep.subr.mxu0 0.0
    %1996 = vmatpush1.msra.mxu0 0.0
    %1997 = vmatprep.subr.mxu0 0.0
    %1998 = vmatpush1.msra.mxu0 0.0
    %1999 = vmatprep.subr.mxu0 0.0
    %2000 = vmatpush1.msra.mxu0 0.0
    %2001 = vmatprep.subr.mxu0 0.0
    %2002 = vmatpush1.msra.mxu0 0.0
    %2003 = vmatprep.subr.mxu0 0.0
    %2004 = vmatpush1.msra.mxu0 0.0
    %2005 = vmatprep.subr.mxu0 0.0
    %2006 = vmatpush1.msra.mxu0 0.0
    %2007 = vmatprep.subr.mxu0 0.0
    %2008 = vmatpush1.msra.mxu0 0.0
    %2009 = vmatprep.subr.mxu0 0.0
    %2010 = vmatpush1.msra.mxu0 0.0
    %2011 = vmatprep.subr.mxu0 0.0
    %2012 = vmatpush1.msra.mxu0 0.0
    %2013 = vmatprep.subr.mxu0 0.0
    %2014 = vmatpush1.msra.mxu0 0.0
    %2015 = vmatprep.subr.mxu0 0.0
    %2016 = vmatpush1.msra.mxu0 0.0
    %2017 = vmatprep.subr.mxu0 0.0
    %2018 = vmatpush1.msra.mxu0 0.0
    %2019 = vmatprep.subr.mxu0 0.0
    %2020 = vmatpush1.msra.mxu0 0.0
    %2021 = vmatprep.subr.mxu0 0.0
    %2022 = vmatpush1.msra.mxu0 0.0
    %2023 = vmatprep.subr.mxu0 0.0
    %2024 = vmatpush1.msra.mxu0 0.0
    %2025 = vmatprep.subr.mxu0 0.0
    %2026 = vmatpush1.msra.mxu0 0.0
    %2027 = vmatprep.subr.mxu0 0.0
    %2028 = vmatpush1.msra.mxu0 0.0
    %2029 = vmatprep.subr.mxu0 0.0
    %2030 = vmatpush1.msra.mxu0 0.0
    %2031 = vmatprep.subr.mxu0 0.0
    %2032 = vmatpush1.msra.mxu0 0.0
    %2033 = vmatprep.subr.mxu0 0.0
    %2034 = vmatpush1.msra.mxu0 0.0
    %2035 = vmatprep.subr.mxu0 0.0
    %2036 = vmatpush1.msra.mxu0 0.0
    %2037 = vmatprep.subr.mxu0 0.0
    %2038 = vmatpush1.msra.mxu0 0.0
    %2039 = vmatprep.subr.mxu0 0.0
    %2040 = vmatpush1.msra.mxu0 0.0
    %2041 = vmatprep.subr.mxu0 0.0
    %2042 = vmatpush1.msra.mxu0 0.0
    %2043 = vmatprep.mubr.f32.mxu0 0.0
    %v2044 = vand.u32 %v1977, 4294901760
    %v2045 = vsub.f32 %v1977, %v2044
    %v2046 = vand.u32 %v2045, 4294901760
    %v2047 = vsub.f32 %v2045, %v2046
    %v2048 = vand.u32 %v2047, 4294901760
    %2049 = vmatmul.mubr.f32.gmra.mrb[0].mxu0 %v2048
    %v2050 = vpop.f32.mrb[0].mxu0
    %v2051 = vadd.f32 0.0, %v2050
    %v2052 = vpop.f32.mrb[0].mxu0
    %2053 = vdwg.mxu0
    %2054 = vmatprep.subr.mxu0 0.0
    %2055 = vmatpush1.msra.mxu0 0.0
    %2056 = vmatprep.subr.mxu0 0.0
    %2057 = vmatpush1.msra.mxu0 0.0
    %2058 = vmatprep.subr.mxu0 0.0
    %2059 = vmatpush1.msra.mxu0 0.0
    %2060 = vmatprep.subr.mxu0 0.0
    %2061 = vmatpush1.msra.mxu0 0.0
    %2062 = vmatprep.subr.mxu0 0.0
    %2063 = vmatpush1.msra.mxu0 0.0
    %2064 = vmatprep.subr.mxu0 0.0
    %2065 = vmatpush1.msra.mxu0 0.0
    %2066 = vmatprep.subr.mxu0 0.0
    %2067 = vmatpush1.msra.mxu0 0.0
    %2068 = vmatprep.subr.mxu0 0.0
    %2069 = vmatpush1.msra.mxu0 0.0
    %2070 = vmatprep.subr.mxu0 0.0
    %2071 = vmatpush1.msra.mxu0 0.0
    %2072 = vmatprep.subr.mxu0 0.0
    %2073 = vmatpush1.msra.mxu0 0.0
    %2074 = vmatprep.subr.mxu0 0.0
    %2075 = vmatpush1.msra.mxu0 0.0
    %2076 = vmatprep.subr.mxu0 0.0
    %2077 = vmatpush1.msra.mxu0 0.0
    %2078 = vmatprep.subr.mxu0 0.0
    %2079 = vmatpush1.msra.mxu0 0.0
    %2080 = vmatprep.subr.mxu0 0.0
    %2081 = vmatpush1.msra.mxu0 0.0
    %2082 = vmatprep.subr.mxu0 0.0
    %2083 = vmatpush1.msra.mxu0 0.0
    %2084 = vmatprep.subr.mxu0 0.0
    %2085 = vmatpush1.msra.mxu0 0.0
    %2086 = vmatprep.subr.mxu0 0.0
    %2087 = vmatpush1.msra.mxu0 0.0
    %2088 = vmatprep.subr.mxu0 0.0
    %2089 = vmatpush1.msra.mxu0 0.0
    %2090 = vmatprep.subr.mxu0 0.0
    %2091 = vmatpush1.msra.mxu0 0.0
    %2092 = vmatprep.subr.mxu0 0.0
    %2093 = vmatpush1.msra.mxu0 0.0
    %2094 = vmatprep.subr.mxu0 0.0
    %2095 = vmatpush1.msra.mxu0 0.0
    %2096 = vmatprep.subr.mxu0 0.0
    %2097 = vmatpush1.msra.mxu0 0.0
    %2098 = vmatprep.subr.mxu0 0.0
    %2099 = vmatpush1.msra.mxu0 0.0
    %2100 = vmatprep.subr.mxu0 0.0
    %2101 = vmatpush1.msra.mxu0 0.0
    %2102 = vmatprep.subr.mxu0 0.0
    %2103 = vmatpush1.msra.mxu0 0.0
    %2104 = vmatprep.subr.mxu0 0.0
    %2105 = vmatpush1.msra.mxu0 0.0
    %2106 = vmatprep.subr.mxu0 0.0
    %2107 = vmatpush1.msra.mxu0 0.0
    %2108 = vmatprep.subr.mxu0 0.0
    %2109 = vmatpush1.msra.mxu0 0.0
    %2110 = vmatprep.subr.mxu0 0.0
    %2111 = vmatpush1.msra.mxu0 0.0
    %2112 = vmatprep.subr.mxu0 0.0
    %2113 = vmatpush1.msra.mxu0 0.0
    %2114 = vmatprep.subr.mxu0 0.0
    %2115 = vmatpush1.msra.mxu0 0.0
    %2116 = vmatprep.subr.mxu0 0.0
    %2117 = vmatpush1.msra.mxu0 0.0
    %2118 = vmatprep.mubr.f32.mxu0 0.0
    %v2119 = vand.u32 %v1977, 4294901760
    %2120 = vmatmul.mubr.f32.gmra.mrb[0].mxu0 %v2119
    %v2121 = vpop.f32.mrb[0].mxu0
    %v2122 = vadd.f32 %v2051, %v2121
    %v2123 = vpop.f32.mrb[0].mxu0
    %2124 = vdwg.mxu0
    %2125 = vmatprep.subr.mxu0 0.0
    %2126 = vmatpush1.msra.mxu0 0.0
    %2127 = vmatprep.subr.mxu0 0.0
    %2128 = vmatpush1.msra.mxu0 0.0
    %2129 = vmatprep.subr.mxu0 0.0
    %2130 = vmatpush1.msra.mxu0 0.0
    %2131 = vmatprep.subr.mxu0 0.0
    %2132 = vmatpush1.msra.mxu0 0.0
    %2133 = vmatprep.subr.mxu0 0.0
    %2134 = vmatpush1.msra.mxu0 0.0
    %2135 = vmatprep.subr.mxu0 0.0
    %2136 = vmatpush1.msra.mxu0 0.0
    %2137 = vmatprep.subr.mxu0 0.0
    %2138 = vmatpush1.msra.mxu0 0.0
    %2139 = vmatprep.subr.mxu0 0.0
    %2140 = vmatpush1.msra.mxu0 0.0
    %2141 = vmatprep.subr.mxu0 0.0
    %2142 = vmatpush1.msra.mxu0 0.0
    %2143 = vmatprep.subr.mxu0 0.0
    %2144 = vmatpush1.msra.mxu0 0.0
    %2145 = vmatprep.subr.mxu0 0.0
    %2146 = vmatpush1.msra.mxu0 0.0
    %2147 = vmatprep.subr.mxu0 0.0
    %2148 = vmatpush1.msra.mxu0 0.0
    %2149 = vmatprep.subr.mxu0 0.0
    %2150 = vmatpush1.msra.mxu0 0.0
    %2151 = vmatprep.subr.mxu0 0.0
    %2152 = vmatpush1.msra.mxu0 0.0
    %2153 = vmatprep.subr.mxu0 0.0
    %2154 = vmatpush1.msra.mxu0 0.0
    %2155 = vmatprep.subr.mxu0 0.0
    %2156 = vmatpush1.msra.mxu0 0.0
    %2157 = vmatprep.subr.mxu0 0.0
    %2158 = vmatpush1.msra.mxu0 0.0
    %2159 = vmatprep.subr.mxu0 0.0
    %2160 = vmatpush1.msra.mxu0 0.0
    %2161 = vmatprep.subr.mxu0 0.0
    %2162 = vmatpush1.msra.mxu0 0.0
    %2163 = vmatprep.subr.mxu0 0.0
    %2164 = vmatpush1.msra.mxu0 0.0
    %2165 = vmatprep.subr.mxu0 0.0
    %2166 = vmatpush1.msra.mxu0 0.0
    %2167 = vmatprep.subr.mxu0 0.0
    %2168 = vmatpush1.msra.mxu0 0.0
    %2169 = vmatprep.subr.mxu0 0.0
    %2170 = vmatpush1.msra.mxu0 0.0
    %2171 = vmatprep.subr.mxu0 0.0
    %2172 = vmatpush1.msra.mxu0 0.0
    %2173 = vmatprep.subr.mxu0 0.0
    %2174 = vmatpush1.msra.mxu0 0.0
    %2175 = vmatprep.subr.mxu0 0.0
    %2176 = vmatpush1.msra.mxu0 0.0
    %2177 = vmatprep.subr.mxu0 0.0
    %2178 = vmatpush1.msra.mxu0 0.0
    %2179 = vmatprep.subr.mxu0 0.0
    %2180 = vmatpush1.msra.mxu0 0.0
    %2181 = vmatprep.subr.mxu0 0.0
    %2182 = vmatpush1.msra.mxu0 0.0
    %2183 = vmatprep.subr.mxu0 0.0
    %2184 = vmatpush1.msra.mxu0 0.0
    %2185 = vmatprep.subr.mxu0 0.0
    %2186 = vmatpush1.msra.mxu0 0.0
    %2187 = vmatprep.subr.mxu0 0.0
    %2188 = vmatpush1.msra.mxu0 0.0
    %2189 = vmatprep.mubr.f32.mxu0 0.0
    %v2190 = vand.u32 %v1977, 4294901760
    %v2191 = vsub.f32 %v1977, %v2190
    %2192 = vmatmul.mubr.f32.gmra.mrb[0].mxu0 %v2191
    %v2193 = vpop.f32.mrb[0].mxu0
    %v2194 = vadd.f32 %v2122, %v2193
    %v2195 = vpop.f32.mrb[0].mxu0
    %2196 = vdwg.mxu0
    %2197 = vmatprep.subr.mxu0 0.0
    %2198 = vmatpush1.msra.mxu0 1.0
    %2199 = vmatprep.subr.mxu0 0.0
    %2200 = vmatpush1.msra.mxu0 1.0
    %2201 = vmatprep.subr.mxu0 0.0
    %2202 = vmatpush1.msra.mxu0 0.0
    %2203 = vmatprep.subr.mxu0 0.0
    %2204 = vmatpush1.msra.mxu0 0.0
    %2205 = vmatprep.subr.mxu0 0.0
    %2206 = vmatpush1.msra.mxu0 0.0
    %2207 = vmatprep.subr.mxu0 0.0
    %2208 = vmatpush1.msra.mxu0 0.0
    %2209 = vmatprep.subr.mxu0 0.0
    %2210 = vmatpush1.msra.mxu0 0.0
    %2211 = vmatprep.subr.mxu0 0.0
    %2212 = vmatpush1.msra.mxu0 0.0
    %2213 = vmatprep.subr.mxu0 0.0
    %2214 = vmatpush1.msra.mxu0 0.0
    %2215 = vmatprep.subr.mxu0 0.0
    %2216 = vmatpush1.msra.mxu0 0.0
    %2217 = vmatprep.subr.mxu0 0.0
    %2218 = vmatpush1.msra.mxu0 0.0
    %2219 = vmatprep.subr.mxu0 0.0
    %2220 = vmatpush1.msra.mxu0 0.0
    %2221 = vmatprep.subr.mxu0 0.0
    %2222 = vmatpush1.msra.mxu0 0.0
    %2223 = vmatprep.subr.mxu0 0.0
    %2224 = vmatpush1.msra.mxu0 0.0
    %2225 = vmatprep.subr.mxu0 0.0
    %2226 = vmatpush1.msra.mxu0 0.0
    %2227 = vmatprep.subr.mxu0 0.0
    %2228 = vmatpush1.msra.mxu0 0.0
    %2229 = vmatprep.subr.mxu0 0.0
    %2230 = vmatpush1.msra.mxu0 0.0
    %2231 = vmatprep.subr.mxu0 0.0
    %2232 = vmatpush1.msra.mxu0 0.0
    %2233 = vmatprep.subr.mxu0 0.0
    %2234 = vmatpush1.msra.mxu0 0.0
    %2235 = vmatprep.subr.mxu0 0.0
    %2236 = vmatpush1.msra.mxu0 0.0
    %2237 = vmatprep.subr.mxu0 0.0
    %2238 = vmatpush1.msra.mxu0 0.0
    %2239 = vmatprep.subr.mxu0 0.0
    %2240 = vmatpush1.msra.mxu0 0.0
    %2241 = vmatprep.subr.mxu0 0.0
    %2242 = vmatpush1.msra.mxu0 0.0
    %2243 = vmatprep.subr.mxu0 0.0
    %2244 = vmatpush1.msra.mxu0 0.0
    %2245 = vmatprep.subr.mxu0 0.0
    %2246 = vmatpush1.msra.mxu0 0.0
    %2247 = vmatprep.subr.mxu0 0.0
    %2248 = vmatpush1.msra.mxu0 0.0
    %2249 = vmatprep.subr.mxu0 0.0
    %2250 = vmatpush1.msra.mxu0 0.0
    %2251 = vmatprep.subr.mxu0 0.0
    %2252 = vmatpush1.msra.mxu0 0.0
    %2253 = vmatprep.subr.mxu0 0.0
    %2254 = vmatpush1.msra.mxu0 0.0
    %2255 = vmatprep.subr.mxu0 0.0
    %2256 = vmatpush1.msra.mxu0 0.0
    %2257 = vmatprep.subr.mxu0 0.0
    %2258 = vmatpush1.msra.mxu0 0.0
    %2259 = vmatprep.subr.mxu0 0.0
    %2260 = vmatpush1.msra.mxu0 0.0
    %2261 = vmatprep.mubr.f32.mxu0 0.0
    %v2262 = vand.u32 %v1977, 4294901760
    %v2263 = vsub.f32 %v1977, %v2262
    %v2264 = vand.u32 %v2263, 4294901760
    %2265 = vmatmul.mubr.f32.gmra.mrb[0].mxu0 %v2264
    %v2266 = vpop.f32.mrb[0].mxu0
    %v2267 = vadd.f32 %v2194, %v2266
    %v2268 = vpop.f32.mrb[0].mxu0
    %2269 = vdwg.mxu0
    %2270 = vmatprep.subr.mxu0 0.0
    %2271 = vmatpush1.msra.mxu0 0.0
    %2272 = vmatprep.subr.mxu0 0.0
    %2273 = vmatpush1.msra.mxu0 0.0
    %2274 = vmatprep.subr.mxu0 0.0
    %2275 = vmatpush1.msra.mxu0 0.0
    %2276 = vmatprep.subr.mxu0 0.0
    %2277 = vmatpush1.msra.mxu0 0.0
    %2278 = vmatprep.subr.mxu0 0.0
    %2279 = vmatpush1.msra.mxu0 0.0
    %2280 = vmatprep.subr.mxu0 0.0
    %2281 = vmatpush1.msra.mxu0 0.0
    %2282 = vmatprep.subr.mxu0 0.0
    %2283 = vmatpush1.msra.mxu0 0.0
    %2284 = vmatprep.subr.mxu0 0.0
    %2285 = vmatpush1.msra.mxu0 0.0
    %2286 = vmatprep.subr.mxu0 0.0
    %2287 = vmatpush1.msra.mxu0 0.0
    %2288 = vmatprep.subr.mxu0 0.0
    %2289 = vmatpush1.msra.mxu0 0.0
    %2290 = vmatprep.subr.mxu0 0.0
    %2291 = vmatpush1.msra.mxu0 0.0
    %2292 = vmatprep.subr.mxu0 0.0
    %2293 = vmatpush1.msra.mxu0 0.0
    %2294 = vmatprep.subr.mxu0 0.0
    %2295 = vmatpush1.msra.mxu0 0.0
    %2296 = vmatprep.subr.mxu0 0.0
    %2297 = vmatpush1.msra.mxu0 0.0
    %2298 = vmatprep.subr.mxu0 0.0
    %2299 = vmatpush1.msra.mxu0 0.0
    %2300 = vmatprep.subr.mxu0 0.0
    %2301 = vmatpush1.msra.mxu0 0.0
    %2302 = vmatprep.subr.mxu0 0.0
    %2303 = vmatpush1.msra.mxu0 0.0
    %2304 = vmatprep.subr.mxu0 0.0
    %2305 = vmatpush1.msra.mxu0 0.0
    %2306 = vmatprep.subr.mxu0 0.0
    %2307 = vmatpush1.msra.mxu0 0.0
    %2308 = vmatprep.subr.mxu0 0.0
    %2309 = vmatpush1.msra.mxu0 0.0
    %2310 = vmatprep.subr.mxu0 0.0
    %2311 = vmatpush1.msra.mxu0 0.0
    %2312 = vmatprep.subr.mxu0 0.0
    %2313 = vmatpush1.msra.mxu0 0.0
    %2314 = vmatprep.subr.mxu0 0.0
    %2315 = vmatpush1.msra.mxu0 0.0
    %2316 = vmatprep.subr.mxu0 0.0
    %2317 = vmatpush1.msra.mxu0 0.0
    %2318 = vmatprep.subr.mxu0 0.0
    %2319 = vmatpush1.msra.mxu0 0.0
    %2320 = vmatprep.subr.mxu0 0.0
    %2321 = vmatpush1.msra.mxu0 0.0
    %2322 = vmatprep.subr.mxu0 0.0
    %2323 = vmatpush1.msra.mxu0 0.0
    %2324 = vmatprep.subr.mxu0 0.0
    %2325 = vmatpush1.msra.mxu0 0.0
    %2326 = vmatprep.subr.mxu0 0.0
    %2327 = vmatpush1.msra.mxu0 0.0
    %2328 = vmatprep.subr.mxu0 0.0
    %2329 = vmatpush1.msra.mxu0 0.0
    %2330 = vmatprep.subr.mxu0 0.0
    %2331 = vmatpush1.msra.mxu0 0.0
    %2332 = vmatprep.subr.mxu0 0.0
    %2333 = vmatpush1.msra.mxu0 0.0
    %2334 = vmatprep.mubr.f32.mxu0 0.0
    %v2335 = vand.u32 %v1977, 4294901760
    %2336 = vmatmul.mubr.f32.gmra.mrb[0].mxu0 %v2335
    %v2337 = vpop.f32.mrb[0].mxu0
    %v2338 = vadd.f32 %v2267, %v2337
    %v2339 = vpop.f32.mrb[0].mxu0
    %2340 = vdwg.mxu0
    %2341 = vmatprep.subr.mxu0 0.0
    %2342 = vmatpush1.msra.mxu0 1.0
    %2343 = vmatprep.subr.mxu0 0.0
    %2344 = vmatpush1.msra.mxu0 1.0
    %2345 = vmatprep.subr.mxu0 0.0
    %2346 = vmatpush1.msra.mxu0 0.0
    %2347 = vmatprep.subr.mxu0 0.0
    %2348 = vmatpush1.msra.mxu0 0.0
    %2349 = vmatprep.subr.mxu0 0.0
    %2350 = vmatpush1.msra.mxu0 0.0
    %2351 = vmatprep.subr.mxu0 0.0
    %2352 = vmatpush1.msra.mxu0 0.0
    %2353 = vmatprep.subr.mxu0 0.0
    %2354 = vmatpush1.msra.mxu0 0.0
    %2355 = vmatprep.subr.mxu0 0.0
    %2356 = vmatpush1.msra.mxu0 0.0
    %2357 = vmatprep.subr.mxu0 0.0
    %2358 = vmatpush1.msra.mxu0 0.0
    %2359 = vmatprep.subr.mxu0 0.0
    %2360 = vmatpush1.msra.mxu0 0.0
    %2361 = vmatprep.subr.mxu0 0.0
    %2362 = vmatpush1.msra.mxu0 0.0
    %2363 = vmatprep.subr.mxu0 0.0
    %2364 = vmatpush1.msra.mxu0 0.0
    %2365 = vmatprep.subr.mxu0 0.0
    %2366 = vmatpush1.msra.mxu0 0.0
    %2367 = vmatprep.subr.mxu0 0.0
    %2368 = vmatpush1.msra.mxu0 0.0
    %2369 = vmatprep.subr.mxu0 0.0
    %2370 = vmatpush1.msra.mxu0 0.0
    %2371 = vmatprep.subr.mxu0 0.0
    %2372 = vmatpush1.msra.mxu0 0.0
    %2373 = vmatprep.subr.mxu0 0.0
    %2374 = vmatpush1.msra.mxu0 0.0
    %2375 = vmatprep.subr.mxu0 0.0
    %2376 = vmatpush1.msra.mxu0 0.0
    %2377 = vmatprep.subr.mxu0 0.0
    %2378 = vmatpush1.msra.mxu0 0.0
    %2379 = vmatprep.subr.mxu0 0.0
    %2380 = vmatpush1.msra.mxu0 0.0
    %2381 = vmatprep.subr.mxu0 0.0
    %2382 = vmatpush1.msra.mxu0 0.0
    %2383 = vmatprep.subr.mxu0 0.0
    %2384 = vmatpush1.msra.mxu0 0.0
    %2385 = vmatprep.subr.mxu0 0.0
    %2386 = vmatpush1.msra.mxu0 0.0
    %2387 = vmatprep.subr.mxu0 0.0
    %2388 = vmatpush1.msra.mxu0 0.0
    %2389 = vmatprep.subr.mxu0 0.0
    %2390 = vmatpush1.msra.mxu0 0.0
    %2391 = vmatprep.subr.mxu0 0.0
    %2392 = vmatpush1.msra.mxu0 0.0
    %2393 = vmatprep.subr.mxu0 0.0
    %2394 = vmatpush1.msra.mxu0 0.0
    %2395 = vmatprep.subr.mxu0 0.0
    %2396 = vmatpush1.msra.mxu0 0.0
    %2397 = vmatprep.subr.mxu0 0.0
    %2398 = vmatpush1.msra.mxu0 0.0
    %2399 = vmatprep.subr.mxu0 0.0
    %2400 = vmatpush1.msra.mxu0 0.0
    %2401 = vmatprep.subr.mxu0 0.0
    %2402 = vmatpush1.msra.mxu0 0.0
    %2403 = vmatprep.subr.mxu0 0.0
    %2404 = vmatpush1.msra.mxu0 0.0
    %2405 = vmatprep.mubr.f32.mxu0 0.0
    %v2406 = vand.u32 %v1977, 4294901760
    %2407 = vmatmul.mubr.f32.gmra.mrb[0].mxu0 %v2406
    %v2408 = vpop.f32.mrb[0].mxu0
    %v2409 = vadd.f32 %v2338, %v2408
    %v2410 = vpop.f32.mrb[0].mxu0
    %2411 = vdwg.mxu0
    %v2412 = vmul.f32 %v2409, 0.0625
    %v2413 = vadd.f32 %v2412, 1e-05
    %v2414 = vrsqrt.pop %v2413
    %v2415 = vmul.f32 %v1974, %v2414
    %v2416 = vlaneseq
    %v2417 = vshrl.u32 %v2416, 7
    %v2418 = vsub.s32 1, %v2417
    %v2419 = vrot.slane %v1457, %v2418
    %v2420 = vmul.f32 %v2415, %v2419
    %v2421 = vlaneseq
    %v2422 = vshrl.u32 %v2421, 7
    %v2423 = vsub.s32 2, %v2422
    %v2424 = vrot.slane %v1457, %v2423
    %v2425 = vadd.f32 %v2420, %v2424
    %v2426 = vsel %vm1536, %v2425, -inf
    %2427 = vmax.xlane.f32.xlu0 %v2426
    %v2428 = vpop.xlane.xlu0 %2427
    %v2429 = vsub.f32 %v2425, %v2428
    %v2430 = vmul.f32 %v2429, 1.442695
    %v2431 = vpow.pop %v2430
    %v2433 = vsel %vm1536, %v2431, 0
    %2435 = vmatprep.subr.mxu0 0.0
    %2436 = vmatpush1.msra.mxu0 1.0
    %2437 = vmatprep.subr.mxu0 0.0
    %2438 = vmatpush1.msra.mxu0 1.0
    %2439 = vmatprep.subr.mxu0 0.0
    %2440 = vmatpush1.msra.mxu0 0.0
    %2441 = vmatprep.subr.mxu0 0.0
    %2442 = vmatpush1.msra.mxu0 0.0
    %2443 = vmatprep.subr.mxu0 0.0
    %2444 = vmatpush1.msra.mxu0 0.0
    %2445 = vmatprep.subr.mxu0 0.0
    %2446 = vmatpush1.msra.mxu0 0.0
    %2447 = vmatprep.subr.mxu0 0.0
    %2448 = vmatpush1.msra.mxu0 0.0
    %2449 = vmatprep.subr.mxu0 0.0
    %2450 = vmatpush1.msra.mxu0 0.0
    %2451 = vmatprep.subr.mxu0 0.0
    %2452 = vmatpush1.msra.mxu0 0.0
    %2453 = vmatprep.subr.mxu0 0.0
    %2454 = vmatpush1.msra.mxu0 0.0
    %2455 = vmatprep.subr.mxu0 0.0
    %2456 = vmatpush1.msra.mxu0 0.0
    %2457 = vmatprep.subr.mxu0 0.0
    %2458 = vmatpush1.msra.mxu0 0.0
    %2459 = vmatprep.subr.mxu0 0.0
    %2460 = vmatpush1.msra.mxu0 0.0
    %2461 = vmatprep.subr.mxu0 0.0
    %2462 = vmatpush1.msra.mxu0 0.0
    %2463 = vmatprep.subr.mxu0 0.0
    %2464 = vmatpush1.msra.mxu0 0.0
    %2465 = vmatprep.subr.mxu0 0.0
    %2466 = vmatpush1.msra.mxu0 0.0
    %2467 = vmatprep.subr.mxu0 0.0
    %2468 = vmatpush1.msra.mxu0 0.0
    %2469 = vmatprep.subr.mxu0 0.0
    %2470 = vmatpush1.msra.mxu0 0.0
    %2471 = vmatprep.subr.mxu0 0.0
    %2472 = vmatpush1.msra.mxu0 0.0
    %2473 = vmatprep.subr.mxu0 0.0
    %2474 = vmatpush1.msra.mxu0 0.0
    %2475 = vmatprep.subr.mxu0 0.0
    %2476 = vmatpush1.msra.mxu0 0.0
    %2477 = vmatprep.subr.mxu0 0.0
    %2478 = vmatpush1.msra.mxu0 0.0
    %2479 = vmatprep.subr.mxu0 0.0
    %2480 = vmatpush1.msra.mxu0 0.0
    %2481 = vmatprep.subr.mxu0 0.0
    %2482 = vmatpush1.msra.mxu0 0.0
    %2483 = vmatprep.subr.mxu0 0.0
    %2484 = vmatpush1.msra.mxu0 0.0
    %2485 = vmatprep.subr.mxu0 0.0
    %2486 = vmatpush1.msra.mxu0 0.0
    %2487 = vmatprep.subr.mxu0 0.0
    %2488 = vmatpush1.msra.mxu0 0.0
    %2489 = vmatprep.subr.mxu0 0.0
    %2490 = vmatpush1.msra.mxu0 0.0
    %2491 = vmatprep.subr.mxu0 0.0
    %2492 = vmatpush1.msra.mxu0 0.0
    %2493 = vmatprep.subr.mxu0 0.0
    %2494 = vmatpush1.msra.mxu0 0.0
    %2495 = vmatprep.subr.mxu0 0.0
    %2496 = vmatpush1.msra.mxu0 0.0
    %2497 = vmatprep.subr.mxu0 0.0
    %2498 = vmatpush1.msra.mxu0 0.0
    %2499 = vmatprep.mubr.f32.mxu0 0.0
    %v2500 = vand.u32 %v2433, 4294901760
    %v2501 = vsub.f32 %v2433, %v2500
    %v2502 = vand.u32 %v2501, 4294901760
    %v2503 = vsub.f32 %v2501, %v2502
    %v2504 = vand.u32 %v2503, 4294901760
    %2505 = vmatmul.mubr.f32.gmra.mrb[0].mxu0 %v2504
    %v2506 = vpop.f32.mrb[0].mxu0
    %v2507 = vadd.f32 0.0, %v2506
    %v2508 = vpop.f32.mrb[0].mxu0
    %2509 = vdwg.mxu0
    %2510 = vmatprep.subr.mxu0 0.0
    %2511 = vmatpush1.msra.mxu0 0.0
    %2512 = vmatprep.subr.mxu0 0.0
    %2513 = vmatpush1.msra.mxu0 0.0
    %2514 = vmatprep.subr.mxu0 0.0
    %2515 = vmatpush1.msra.mxu0 0.0
    %2516 = vmatprep.subr.mxu0 0.0
    %2517 = vmatpush1.msra.mxu0 0.0
    %2518 = vmatprep.subr.mxu0 0.0
    %2519 = vmatpush1.msra.mxu0 0.0
    %2520 = vmatprep.subr.mxu0 0.0
    %2521 = vmatpush1.msra.mxu0 0.0
    %2522 = vmatprep.subr.mxu0 0.0
    %2523 = vmatpush1.msra.mxu0 0.0
    %2524 = vmatprep.subr.mxu0 0.0
    %2525 = vmatpush1.msra.mxu0 0.0
    %2526 = vmatprep.subr.mxu0 0.0
    %2527 = vmatpush1.msra.mxu0 0.0
    %2528 = vmatprep.subr.mxu0 0.0
    %2529 = vmatpush1.msra.mxu0 0.0
    %2530 = vmatprep.subr.mxu0 0.0
    %2531 = vmatpush1.msra.mxu0 0.0
    %2532 = vmatprep.subr.mxu0 0.0
    %2533 = vmatpush1.msra.mxu0 0.0
    %2534 = vmatprep.subr.mxu0 0.0
    %2535 = vmatpush1.msra.mxu0 0.0
    %2536 = vmatprep.subr.mxu0 0.0
    %2537 = vmatpush1.msra.mxu0 0.0
    %2538 = vmatprep.subr.mxu0 0.0
    %2539 = vmatpush1.msra.mxu0 0.0
    %2540 = vmatprep.subr.mxu0 0.0
    %2541 = vmatpush1.msra.mxu0 0.0
    %2542 = vmatprep.subr.mxu0 0.0
    %2543 = vmatpush1.msra.mxu0 0.0
    %2544 = vmatprep.subr.mxu0 0.0
    %2545 = vmatpush1.msra.mxu0 0.0
    %2546 = vmatprep.subr.mxu0 0.0
    %2547 = vmatpush1.msra.mxu0 0.0
    %2548 = vmatprep.subr.mxu0 0.0
    %2549 = vmatpush1.msra.mxu0 0.0
    %2550 = vmatprep.subr.mxu0 0.0
    %2551 = vmatpush1.msra.mxu0 0.0
    %2552 = vmatprep.subr.mxu0 0.0
    %2553 = vmatpush1.msra.mxu0 0.0
    %2554 = vmatprep.subr.mxu0 0.0
    %2555 = vmatpush1.msra.mxu0 0.0
    %2556 = vmatprep.subr.mxu0 0.0
    %2557 = vmatpush1.msra.mxu0 0.0
    %2558 = vmatprep.subr.mxu0 0.0
    %2559 = vmatpush1.msra.mxu0 0.0
    %2560 = vmatprep.subr.mxu0 0.0
    %2561 = vmatpush1.msra.mxu0 0.0
    %2562 = vmatprep.subr.mxu0 0.0
    %2563 = vmatpush1.msra.mxu0 0.0
    %2564 = vmatprep.subr.mxu0 0.0
    %2565 = vmatpush1.msra.mxu0 0.0
    %2566 = vmatprep.subr.mxu0 0.0
    %2567 = vmatpush1.msra.mxu0 0.0
    %2568 = vmatprep.subr.mxu0 0.0
    %2569 = vmatpush1.msra.mxu0 0.0
    %2570 = vmatprep.subr.mxu0 0.0
    %2571 = vmatpush1.msra.mxu0 0.0
    %2572 = vmatprep.subr.mxu0 0.0
    %2573 = vmatpush1.msra.mxu0 0.0
    %2574 = vmatprep.mubr.f32.mxu0 0.0
    %v2575 = vand.u32 %v2433, 4294901760
    %2576 = vmatmul.mubr.f32.gmra.mrb[0].mxu0 %v2575
    %v2577 = vpop.f32.mrb[0].mxu0
    %v2578 = vadd.f32 %v2507, %v2577
    %v2579 = vpop.f32.mrb[0].mxu0
    %2580 = vdwg.mxu0
    %2581 = vmatprep.subr.mxu0 0.0
    %2582 = vmatpush1.msra.mxu0 0.0
    %2583 = vmatprep.subr.mxu0 0.0
    %2584 = vmatpush1.msra.mxu0 0.0
    %2585 = vmatprep.subr.mxu0 0.0
    %2586 = vmatpush1.msra.mxu0 0.0
    %2587 = vmatprep.subr.mxu0 0.0
    %2588 = vmatpush1.msra.mxu0 0.0
    %2589 = vmatprep.subr.mxu0 0.0
    %2590 = vmatpush1.msra.mxu0 0.0
    %2591 = vmatprep.subr.mxu0 0.0
    %2592 = vmatpush1.msra.mxu0 0.0
    %2593 = vmatprep.subr.mxu0 0.0
    %2594 = vmatpush1.msra.mxu0 0.0
    %2595 = vmatprep.subr.mxu0 0.0
    %2596 = vmatpush1.msra.mxu0 0.0
    %2597 = vmatprep.subr.mxu0 0.0
    %2598 = vmatpush1.msra.mxu0 0.0
    %2599 = vmatprep.subr.mxu0 0.0
    %2600 = vmatpush1.msra.mxu0 0.0
    %2601 = vmatprep.subr.mxu0 0.0
    %2602 = vmatpush1.msra.mxu0 0.0
    %2603 = vmatprep.subr.mxu0 0.0
    %2604 = vmatpush1.msra.mxu0 0.0
    %2605 = vmatprep.subr.mxu0 0.0
    %2606 = vmatpush1.msra.mxu0 0.0
    %2607 = vmatprep.subr.mxu0 0.0
    %2608 = vmatpush1.msra.mxu0 0.0
    %2609 = vmatprep.subr.mxu0 0.0
    %2610 = vmatpush1.msra.mxu0 0.0
    %2611 = vmatprep.subr.mxu0 0.0
    %2612 = vmatpush1.msra.mxu0 0.0
    %2613 = vmatprep.subr.mxu0 0.0
    %2614 = vmatpush1.msra.mxu0 0.0
    %2615 = vmatprep.subr.mxu0 0.0
    %2616 = vmatpush1.msra.mxu0 0.0
    %2617 = vmatprep.subr.mxu0 0.0
    %2618 = vmatpush1.msra.mxu0 0.0
    %2619 = vmatprep.subr.mxu0 0.0
    %2620 = vmatpush1.msra.mxu0 0.0
    %2621 = vmatprep.subr.mxu0 0.0
    %2622 = vmatpush1.msra.mxu0 0.0
    %2623 = vmatprep.subr.mxu0 0.0
    %2624 = vmatpush1.msra.mxu0 0.0
    %2625 = vmatprep.subr.mxu0 0.0
    %2626 = vmatpush1.msra.mxu0 0.0
    %2627 = vmatprep.subr.mxu0 0.0
    %2628 = vmatpush1.msra.mxu0 0.0
    %2629 = vmatprep.subr.mxu0 0.0
    %2630 = vmatpush1.msra.mxu0 0.0
    %2631 = vmatprep.subr.mxu0 0.0
    %2632 = vmatpush1.msra.mxu0 0.0
    %2633 = vmatprep.subr.mxu0 0.0
    %2634 = vmatpush1.msra.mxu0 0.0
    %2635 = vmatprep.subr.mxu0 0.0
    %2636 = vmatpush1.msra.mxu0 0.0
    %2637 = vmatprep.subr.mxu0 0.0
    %2638 = vmatpush1.msra.mxu0 0.0
    %2639 = vmatprep.subr.mxu0 0.0
    %2640 = vmatpush1.msra.mxu0 0.0
    %2641 = vmatprep.subr.mxu0 0.0
    %2642 = vmatpush1.msra.mxu0 0.0
    %2643 = vmatprep.subr.mxu0 0.0
    %2644 = vmatpush1.msra.mxu0 0.0
    %2645 = vmatprep.mubr.f32.mxu0 0.0
    %v2646 = vand.u32 %v2433, 4294901760
    %v2647 = vsub.f32 %v2433, %v2646
    %2648 = vmatmul.mubr.f32.gmra.mrb[0].mxu0 %v2647
    %v2649 = vpop.f32.mrb[0].mxu0
    %v2650 = vadd.f32 %v2578, %v2649
    %v2651 = vpop.f32.mrb[0].mxu0
    %2652 = vdwg.mxu0
    %2653 = vmatprep.subr.mxu0 0.0
    %2654 = vmatpush1.msra.mxu0 1.0
    %2655 = vmatprep.subr.mxu0 0.0
    %2656 = vmatpush1.msra.mxu0 1.0
    %2657 = vmatprep.subr.mxu0 0.0
    %2658 = vmatpush1.msra.mxu0 0.0
    %2659 = vmatprep.subr.mxu0 0.0
    %2660 = vmatpush1.msra.mxu0 0.0
    %2661 = vmatprep.subr.mxu0 0.0
    %2662 = vmatpush1.msra.mxu0 0.0
    %2663 = vmatprep.subr.mxu0 0.0
    %2664 = vmatpush1.msra.mxu0 0.0
    %2665 = vmatprep.subr.mxu0 0.0
    %2666 = vmatpush1.msra.mxu0 0.0
    %2667 = vmatprep.subr.mxu0 0.0
    %2668 = vmatpush1.msra.mxu0 0.0
    %2669 = vmatprep.subr.mxu0 0.0
    %2670 = vmatpush1.msra.mxu0 0.0
    %2671 = vmatprep.subr.mxu0 0.0
    %2672 = vmatpush1.msra.mxu0 0.0
    %2673 = vmatprep.subr.mxu0 0.0
    %2674 = vmatpush1.msra.mxu0 0.0
    %2675 = vmatprep.subr.mxu0 0.0
    %2676 = vmatpush1.msra.mxu0 0.0
    %2677 = vmatprep.subr.mxu0 0.0
    %2678 = vmatpush1.msra.mxu0 0.0
    %2679 = vmatprep.subr.mxu0 0.0
    %2680 = vmatpush1.msra.mxu0 0.0
    %2681 = vmatprep.subr.mxu0 0.0
    %2682 = vmatpush1.msra.mxu0 0.0
    %2683 = vmatprep.subr.mxu0 0.0
    %2684 = vmatpush1.msra.mxu0 0.0
    %2685 = vmatprep.subr.mxu0 0.0
    %2686 = vmatpush1.msra.mxu0 0.0
    %2687 = vmatprep.subr.mxu0 0.0
    %2688 = vmatpush1.msra.mxu0 0.0
    %2689 = vmatprep.subr.mxu0 0.0
    %2690 = vmatpush1.msra.mxu0 0.0
    %2691 = vmatprep.subr.mxu0 0.0
    %2692 = vmatpush1.msra.mxu0 0.0
    %2693 = vmatprep.subr.mxu0 0.0
    %2694 = vmatpush1.msra.mxu0 0.0
    %2695 = vmatprep.subr.mxu0 0.0
    %2696 = vmatpush1.msra.mxu0 0.0
    %2697 = vmatprep.subr.mxu0 0.0
    %2698 = vmatpush1.msra.mxu0 0.0
    %2699 = vmatprep.subr.mxu0 0.0
    %2700 = vmatpush1.msra.mxu0 0.0
    %2701 = vmatprep.subr.mxu0 0.0
    %2702 = vmatpush1.msra.mxu0 0.0
    %2703 = vmatprep.subr.mxu0 0.0
    %2704 = vmatpush1.msra.mxu0 0.0
    %2705 = vmatprep.subr.mxu0 0.0
    %2706 = vmatpush1.msra.mxu0 0.0
    %2707 = vmatprep.subr.mxu0 0.0
    %2708 = vmatpush1.msra.mxu0 0.0
    %2709 = vmatprep.subr.mxu0 0.0
    %2710 = vmatpush1.msra.mxu0 0.0
    %2711 = vmatprep.subr.mxu0 0.0
    %2712 = vmatpush1.msra.mxu0 0.0
    %2713 = vmatprep.subr.mxu0 0.0
    %2714 = vmatpush1.msra.mxu0 0.0
    %2715 = vmatprep.subr.mxu0 0.0
    %2716 = vmatpush1.msra.mxu0 0.0
    %2717 = vmatprep.mubr.f32.mxu0 0.0
    %v2718 = vand.u32 %v2433, 4294901760
    %v2719 = vsub.f32 %v2433, %v2718
    %v2720 = vand.u32 %v2719, 4294901760
    %2721 = vmatmul.mubr.f32.gmra.mrb[0].mxu0 %v2720
    %v2722 = vpop.f32.mrb[0].mxu0
    %v2723 = vadd.f32 %v2650, %v2722
    %v2724 = vpop.f32.mrb[0].mxu0
    %2725 = vdwg.mxu0
    %2726 = vmatprep.subr.mxu0 0.0
    %2727 = vmatpush1.msra.mxu0 0.0
    %2728 = vmatprep.subr.mxu0 0.0
    %2729 = vmatpush1.msra.mxu0 0.0
    %2730 = vmatprep.subr.mxu0 0.0
    %2731 = vmatpush1.msra.mxu0 0.0
    %2732 = vmatprep.subr.mxu0 0.0
    %2733 = vmatpush1.msra.mxu0 0.0
    %2734 = vmatprep.subr.mxu0 0.0
    %2735 = vmatpush1.msra.mxu0 0.0
    %2736 = vmatprep.subr.mxu0 0.0
    %2737 = vmatpush1.msra.mxu0 0.0
    %2738 = vmatprep.subr.mxu0 0.0
    %2739 = vmatpush1.msra.mxu0 0.0
    %2740 = vmatprep.subr.mxu0 0.0
    %2741 = vmatpush1.msra.mxu0 0.0
    %2742 = vmatprep.subr.mxu0 0.0
    %2743 = vmatpush1.msra.mxu0 0.0
    %2744 = vmatprep.subr.mxu0 0.0
    %2745 = vmatpush1.msra.mxu0 0.0
    %2746 = vmatprep.subr.mxu0 0.0
    %2747 = vmatpush1.msra.mxu0 0.0
    %2748 = vmatprep.subr.mxu0 0.0
    %2749 = vmatpush1.msra.mxu0 0.0
    %2750 = vmatprep.subr.mxu0 0.0
    %2751 = vmatpush1.msra.mxu0 0.0
    %2752 = vmatprep.subr.mxu0 0.0
    %2753 = vmatpush1.msra.mxu0 0.0
    %2754 = vmatprep.subr.mxu0 0.0
    %2755 = vmatpush1.msra.mxu0 0.0
    %2756 = vmatprep.subr.mxu0 0.0
    %2757 = vmatpush1.msra.mxu0 0.0
    %2758 = vmatprep.subr.mxu0 0.0
    %2759 = vmatpush1.msra.mxu0 0.0
    %2760 = vmatprep.subr.mxu0 0.0
    %2761 = vmatpush1.msra.mxu0 0.0
    %2762 = vmatprep.subr.mxu0 0.0
    %2763 = vmatpush1.msra.mxu0 0.0
    %2764 = vmatprep.subr.mxu0 0.0
    %2765 = vmatpush1.msra.mxu0 0.0
    %2766 = vmatprep.subr.mxu0 0.0
    %2767 = vmatpush1.msra.mxu0 0.0
    %2768 = vmatprep.subr.mxu0 0.0
    %2769 = vmatpush1.msra.mxu0 0.0
    %2770 = vmatprep.subr.mxu0 0.0
    %2771 = vmatpush1.msra.mxu0 0.0
    %2772 = vmatprep.subr.mxu0 0.0
    %2773 = vmatpush1.msra.mxu0 0.0
    %2774 = vmatprep.subr.mxu0 0.0
    %2775 = vmatpush1.msra.mxu0 0.0
    %2776 = vmatprep.subr.mxu0 0.0
    %2777 = vmatpush1.msra.mxu0 0.0
    %2778 = vmatprep.subr.mxu0 0.0
    %2779 = vmatpush1.msra.mxu0 0.0
    %2780 = vmatprep.subr.mxu0 0.0
    %2781 = vmatpush1.msra.mxu0 0.0
    %2782 = vmatprep.subr.mxu0 0.0
    %2783 = vmatpush1.msra.mxu0 0.0
    %2784 = vmatprep.subr.mxu0 0.0
    %2785 = vmatpush1.msra.mxu0 0.0
    %2786 = vmatprep.subr.mxu0 0.0
    %2787 = vmatpush1.msra.mxu0 0.0
    %2788 = vmatprep.subr.mxu0 0.0
    %2789 = vmatpush1.msra.mxu0 0.0
    %2790 = vmatprep.mubr.f32.mxu0 0.0
    %v2791 = vand.u32 %v2433, 4294901760
    %2792 = vmatmul.mubr.f32.gmra.mrb[0].mxu0 %v2791
    %v2793 = vpop.f32.mrb[0].mxu0
    %v2794 = vadd.f32 %v2723, %v2793
    %v2795 = vpop.f32.mrb[0].mxu0
    %2796 = vdwg.mxu0
    %2797 = vmatprep.subr.mxu0 0.0
    %2798 = vmatpush1.msra.mxu0 1.0
    %2799 = vmatprep.subr.mxu0 0.0
    %2800 = vmatpush1.msra.mxu0 1.0
    %2801 = vmatprep.subr.mxu0 0.0
    %2802 = vmatpush1.msra.mxu0 0.0
    %2803 = vmatprep.subr.mxu0 0.0
    %2804 = vmatpush1.msra.mxu0 0.0
    %2805 = vmatprep.subr.mxu0 0.0
    %2806 = vmatpush1.msra.mxu0 0.0
    %2807 = vmatprep.subr.mxu0 0.0
    %2808 = vmatpush1.msra.mxu0 0.0
    %2809 = vmatprep.subr.mxu0 0.0
    %2810 = vmatpush1.msra.mxu0 0.0
    %2811 = vmatprep.subr.mxu0 0.0
    %2812 = vmatpush1.msra.mxu0 0.0
    %2813 = vmatprep.subr.mxu0 0.0
    %2814 = vmatpush1.msra.mxu0 0.0
    %2815 = vmatprep.subr.mxu0 0.0
    %2816 = vmatpush1.msra.mxu0 0.0
    %2817 = vmatprep.subr.mxu0 0.0
    %2818 = vmatpush1.msra.mxu0 0.0
    %2819 = vmatprep.subr.mxu0 0.0
    %2820 = vmatpush1.msra.mxu0 0.0
    %2821 = vmatprep.subr.mxu0 0.0
    %2822 = vmatpush1.msra.mxu0 0.0
    %2823 = vmatprep.subr.mxu0 0.0
    %2824 = vmatpush1.msra.mxu0 0.0
    %2825 = vmatprep.subr.mxu0 0.0
    %2826 = vmatpush1.msra.mxu0 0.0
    %2827 = vmatprep.subr.mxu0 0.0
    %2828 = vmatpush1.msra.mxu0 0.0
    %2829 = vmatprep.subr.mxu0 0.0
    %2830 = vmatpush1.msra.mxu0 0.0
    %2831 = vmatprep.subr.mxu0 0.0
    %2832 = vmatpush1.msra.mxu0 0.0
    %2833 = vmatprep.subr.mxu0 0.0
    %2834 = vmatpush1.msra.mxu0 0.0
    %2835 = vmatprep.subr.mxu0 0.0
    %2836 = vmatpush1.msra.mxu0 0.0
    %2837 = vmatprep.subr.mxu0 0.0
    %2838 = vmatpush1.msra.mxu0 0.0
    %2839 = vmatprep.subr.mxu0 0.0
    %2840 = vmatpush1.msra.mxu0 0.0
    %2841 = vmatprep.subr.mxu0 0.0
    %2842 = vmatpush1.msra.mxu0 0.0
    %2843 = vmatprep.subr.mxu0 0.0
    %2844 = vmatpush1.msra.mxu0 0.0
    %2845 = vmatprep.subr.mxu0 0.0
    %2846 = vmatpush1.msra.mxu0 0.0
    %2847 = vmatprep.subr.mxu0 0.0
    %2848 = vmatpush1.msra.mxu0 0.0
    %2849 = vmatprep.subr.mxu0 0.0
    %2850 = vmatpush1.msra.mxu0 0.0
    %2851 = vmatprep.subr.mxu0 0.0
    %2852 = vmatpush1.msra.mxu0 0.0
    %2853 = vmatprep.subr.mxu0 0.0
    %2854 = vmatpush1.msra.mxu0 0.0
    %2855 = vmatprep.subr.mxu0 0.0
    %2856 = vmatpush1.msra.mxu0 0.0
    %2857 = vmatprep.subr.mxu0 0.0
    %2858 = vmatpush1.msra.mxu0 0.0
    %2859 = vmatprep.subr.mxu0 0.0
    %2860 = vmatpush1.msra.mxu0 0.0
    %2861 = vmatprep.mubr.f32.mxu0 0.0
    %v2862 = vand.u32 %v2433, 4294901760
    %2863 = vmatmul.mubr.f32.gmra.mrb[0].mxu0 %v2862
    %v2864 = vpop.f32.mrb[0].mxu0
    %v2865 = vadd.f32 %v2794, %v2864
    %v2866 = vpop.f32.mrb[0].mxu0
    %2867 = vdwg.mxu0
    %v2868 = vrcp.pop %v2865
    %v2869 = vmul.f32 %v2431, %v2868
    %2871 = vrot.lane.b32.xlu0 %v2869, 32
    %v2872 = vpop.permute.xlu0 %2871
    %v2874 = vsel %vm46, %v1452, %v2872
    %vm2875 = vcmask 392192
    %2876 = vst.msk [vmem:[#allocation5] sm:$0xff] %vm2875, %v2874
    // Predicated region
    $region30: #{tpu_custom_call.1} parent=1 // pred_check
      _
    $region31: #{tpu_custom_call.1} parent=1 // pred_check_branch
      %2878 = sbr.rel (0) target = $region33
    $region32: #{tpu_custom_call.1} parent=1 // pred_region
      %s2880 = ssub.s32 128, 128
      %2881 = vsyncadd [#allocation4], %s2880
      %s2883 = sshll.u32 [#allocation5], 4
      %s2884 = int_to_ptr.vmem [resolvable:$true] %s2883
      %2886 = dma.vmem_to_hbm [thread:$0]  %s2884, 128, %s6, [#allocation4]
    $region33: #{tpu_custom_call.1} parent=1 // pred_fallthru
      _
    // Predicated region
    $region34: #{tpu_custom_call.1} parent=1 // pred_check
      _
    $region35: #{tpu_custom_call.1} parent=1 // pred_check_branch
      %2888 = sbr.rel (0) target = $region37
    $region36: #{tpu_custom_call.1} parent=1 // pred_region
      %2889 = dma.done [#allocation4], 128
    $region37: #{tpu_custom_call.1} parent=1 // pred_fallthru
      _
    %2890 = vsyncpa [#allocation3], 1
    %2891 = vsyncpa [#allocation4], 1

</llo_original>
